<compile_context>
chip_gen: v7x
topology: tpu7x:2x2x1
jax: 0.10.0
libtpu: 0.0.40
codegen_flags: <defaults>
</compile_context>

<pallas_src>
import functools

import jax
import jax.numpy as jnp
from jax.experimental import pallas as pl
from jax.experimental.pallas import tpu as pltpu

LANE = 128


def _round_up(x, m):
    return ((x + m - 1) // m) * m


def _vmem_limit(bytes_est):
    # Leave headroom below physical VMEM (compiler scratch, double buffers not
    # in bytes_est).  v7x: 64 MiB/TC; v5e/v6e: 128 MiB.
    try:
        phys = pltpu.get_tpu_info().vmem_capacity_bytes
    except Exception:  # conservative fallback = v7x per-TC VMEM
        phys = 64 * 2 ** 20
    cap = (phys * 3) // 4
    want = max(32 * 2 ** 20, 2 * bytes_est)
    return int(min(cap, want))


def _pick_batch_tile(B, S, target_rows=256, max_bt=8):
    # Enough rows per step to fill the MXU / amortize grid-step overhead,
    # but keep >=2 grid steps when possible so v7x's two TCs both get work.
    bt = max(1, min(B, max_bt, target_rows // max(S, 1)))
    while B % bt:
        bt -= 1
    if B >= 2 and B // bt < 2:
        bt = max(1, bt // 2)
        while B % bt:
            bt -= 1
    return bt


# ----------------------------------------------------------------------------
# Fused residual-block stack.  One grid step = `bt` sequences; the whole block
# stack runs on the VMEM-resident residual stream.  Each causal dilated conv is
# an im2col scatter into a bf16 [bt*S, K*Cp] slab followed by ONE MXU matmul
# [bt*S, K*Cp] @ [K*Cp, Cp] (bf16 operands, f32 accumulation).
# ----------------------------------------------------------------------------
def fused_blocks_kernel(*refs, n_blocks, kernel_size, dilations, eps, true_c, bt):
    x_ref = refs[0]
    params = refs[1:1 + 10 * n_blocks]
    out_ref = refs[1 + 10 * n_blocks]
    col_ref = refs[2 + 10 * n_blocks]

    S, Cp = x_ref.shape[1], x_ref.shape[2]
    K = kernel_size
    M = bt * S

    inv_c = 1.0 / true_c
    lane = jax.lax.broadcasted_iota(jnp.int32, (1, Cp), 1)
    cmask = (lane < true_c).astype(jnp.float32)   # hoisted out of the block loop

    def layer_norm(h, g, b):
        # Normalize over the true C channels only; padded lanes of the output
        # are exactly (0*g_pad + b_pad) = 0 because g_pad/b_pad are zero.
        mean = jnp.sum(h, axis=-1, keepdims=True) * inv_c
        cen = (h - mean) * cmask
        var = jnp.sum(cen * cen, axis=-1, keepdims=True) * inv_c
        return cen * jax.lax.rsqrt(var + eps) * g + b

    def scatter(h, dil):
        # im2col per batch segment: band j (lanes j*Cp:(j+1)*Cp, lane-aligned)
        # of row t holds h[t - (K-1-j)*dil]; rows above the causal horizon are
        # zero.  Stores bf16 bands directly (slab is bf16 scratch).
        hb = h.astype(jnp.bfloat16)
        pad = min((K - 1) * dil, S)              # static per conv
        for b in range(bt):
            base = b * S
            if pad > 0:
                # Only the causal-pad rows need zeroing; everything else is
                # overwritten below, so no stale data survives across convs.
                col_ref[base:base + pad, :] = jnp.zeros((pad, K * Cp), jnp.bfloat16)
            for j in range(K):
                shift = (K - 1 - j) * dil        # static
                if shift < S:
                    col_ref[base + shift:base + S, j * Cp:(j + 1) * Cp] = (
                        hb[base:base + S - shift, :])

    # Residual stream for this batch tile, flattened to [M, Cp] (f32).
    resid = x_ref[...].reshape(M, Cp).astype(jnp.float32)

    for idx in range(n_blocks):
        (w1, b1, g1, be1, w2, b2, g2, be2, gc1, gc2) = params[10 * idx:10 * (idx + 1)]
        dil = dilations[idx]

        # --- conv1 (dilation d) ---
        scatter(resid, dil)
        h = jnp.dot(col_ref[...], w1[...], preferred_element_type=jnp.float32) + b1[...]
        h = jnp.maximum(layer_norm(h, g1[...], be1[...]), 0.0) * gc1[...]

        # --- conv2 (dilation 2d) ---
        scatter(h, dil * 2)
        h = jnp.dot(col_ref[...], w2[...], preferred_element_type=jnp.float32) + b2[...]
        h = jnp.maximum(layer_norm(h, g2[...], be2[...]), 0.0) * gc2[...]

        resid = resid + h                        # residual

    out_ref[...] = resid.reshape(bt, S, Cp).astype(out_ref.dtype)


def residual_blocks(x, blocks_p, gates, *, kernel_size, dilations, true_c):
    """x: [B, S, Cp] (channel-padded).  Runs the whole residual stack fused."""
    B, S, Cp = x.shape
    K = kernel_size
    n_blocks = len(dilations)
    bt = _pick_batch_tile(B, S)

    def const_spec(shape):
        return pl.BlockSpec(shape, lambda i: (0,) * len(shape))

    flat, specs = [], []
    for blk, (gc1, gc2) in zip(blocks_p, gates):
        for arr, shape in ((blk['w1'], (K * Cp, Cp)), (blk['b1'], (1, Cp)),
                           (blk['g1'], (1, Cp)), (blk['be1'], (1, Cp)),
                           (blk['w2'], (K * Cp, Cp)), (blk['b2'], (1, Cp)),
                           (blk['g2'], (1, Cp)), (blk['be2'], (1, Cp)),
                           (gc1, (1, Cp)), (gc2, (1, Cp))):
            flat.append(arr)
            specs.append(const_spec(shape))

    act_spec = pl.BlockSpec((bt, S, Cp), lambda i: (i, 0, 0))

    kernel = functools.partial(
        fused_blocks_kernel, n_blocks=n_blocks, kernel_size=K,
        dilations=tuple(dilations), eps=1e-8, true_c=true_c, bt=bt)

    bytes_est = (2 * 2 * bt * S * Cp * 4          # double-buffered in/out blocks
                 + n_blocks * 2 * K * Cp * Cp * 2  # bf16 conv weights (resident)
                 + n_blocks * 8 * Cp * 4           # bias/LN/gate vectors
                 + bt * S * K * Cp * 2             # bf16 im2col slab
                 + 2 * bt * S * Cp * 4)            # f32 residual stream value

    return pl.pallas_call(
        kernel,
        out_shape=jax.ShapeDtypeStruct((B, S, Cp), x.dtype),
        grid_spec=pltpu.PrefetchScalarGridSpec(
            num_scalar_prefetch=0,
            grid=(B // bt,),
            in_specs=[act_spec] + specs,
            out_specs=act_spec,
            scratch_shapes=[pltpu.VMEM((bt * S, K * Cp), jnp.bfloat16)]),
        compiler_params=pltpu.CompilerParams(
            dimension_semantics=("parallel",),
            vmem_limit_bytes=_vmem_limit(bytes_est)),
    )(x, *flat)


# ----------------------------------------------------------------------------
# Final projection: hidden [M, Cp] @ W [Cp, Np] + bias, tiled over (M, N).
# Np is a multiple of 128 so output stores are lane-dense; caller slices back.
# ----------------------------------------------------------------------------
def final_linear_kernel(h_ref, w_ref, b_ref, o_ref):
    o_ref[...] = (jnp.dot(h_ref[...], w_ref[...],
                          preferred_element_type=jnp.float32)
                  + b_ref[...]).astype(o_ref.dtype)


def final_linear(h, w_p, b_p, *, tm_cap=256, tn_cap=1024):
    M, Cp = h.shape
    Np = w_p.shape[1]
    tm = M if M <= tm_cap else tm_cap            # full dim or 256-aligned
    tn = Np if Np <= tn_cap else tn_cap          # full dim or multiple of 256
    grid = (pl.cdiv(M, tm), pl.cdiv(Np, tn))

    h16 = h.astype(jnp.bfloat16)
    bytes_est = 2 * (tm * Cp * 2 + Cp * tn * 2 + tn * 4 + tm * tn * 4)

    return pl.pallas_call(
        final_linear_kernel,
        out_shape=jax.ShapeDtypeStruct((M, Np), jnp.float32),
        grid_spec=pltpu.PrefetchScalarGridSpec(
            num_scalar_prefetch=0,
            grid=grid,
            in_specs=[pl.BlockSpec((tm, Cp), lambda i, j: (i, 0)),
                      pl.BlockSpec((Cp, tn), lambda i, j: (0, j)),
                      pl.BlockSpec((1, tn), lambda i, j: (0, j))],
            out_specs=pl.BlockSpec((tm, tn), lambda i, j: (i, j))),
        compiler_params=pltpu.CompilerParams(
            dimension_semantics=("parallel", "parallel"),
            vmem_limit_bytes=_vmem_limit(bytes_est)),
    )(h16, w_p, b_p)


# ----------------------------------------------------------------------------
# Parameter init (deterministic, synthetic) + lane padding.
# ----------------------------------------------------------------------------
def init_params(key, mp):
    C, V, K = mp['dilated_channels'], mp['item_size'], mp['kernel_size']
    lo, hi = mp['task_embs']
    n_blocks = len(mp['dilations'])
    keys = iter(jax.random.split(key, 2 + 6 * n_blocks))
    stdv = (1.0 / V) ** 0.5

    params = {
        'embedding': jax.random.uniform(next(keys), (V, C), jnp.float32, -stdv, stdv),
        # stored already transposed: [C, item_size]
        'final_w': 0.01 * jax.random.normal(next(keys), (C, V), jnp.float32),
        'final_b': jnp.full((1, V), 0.1, jnp.float32),
        'blocks': [],
    }
    for _ in range(n_blocks):
        params['blocks'].append({
            # synthetic conv weights, (K, C_in, C_out) tap-major layout
            'w1': 0.05 * jax.random.normal(next(keys), (K, C, C), jnp.float32),
            'b1': 0.05 * jax.random.normal(next(keys), (1, C), jnp.float32),
            'g1': jnp.ones((1, C), jnp.float32),
            'be1': jnp.zeros((1, C), jnp.float32),
            'w2': 0.05 * jax.random.normal(next(keys), (K, C, C), jnp.float32),
            'b2': 0.05 * jax.random.normal(next(keys), (1, C), jnp.float32),
            'g2': jnp.ones((1, C), jnp.float32),
            'be2': jnp.zeros((1, C), jnp.float32),
            'ec1': jax.random.uniform(next(keys), (6, C), jnp.float32, lo, hi),
            'ec2': jax.random.uniform(next(keys), (6, C), jnp.float32, lo, hi),
        })
    return params


def pad_params(params, mp):
    """Pad channels to Cp = round_up(C,128) and vocab to Np = round_up(V,128)."""
    C, V, K = mp['dilated_channels'], mp['item_size'], mp['kernel_size']
    Cp, Vp = _round_up(C, LANE), _round_up(V, LANE)
    dc, dv = Cp - C, Vp - V

    def pad_vec(v):                       # (1, C) -> (1, Cp), zeros in pad lanes
        return jnp.pad(v, ((0, 0), (0, dc)))

    def pad_conv(w):                      # (K, C, C) -> (K*Cp, Cp), bf16
        wp = jnp.pad(w, ((0, 0), (0, dc), (0, dc)))
        return wp.reshape(K * Cp, Cp).astype(jnp.bfloat16)

    pp = {
        'Cp': Cp, 'Vp': Vp,
        'embedding_p': jnp.pad(params['embedding'], ((0, 0), (0, dc))),
        'final_w_p': jnp.pad(params['final_w'], ((0, dc), (0, dv))).astype(jnp.bfloat16),
        'final_b_p': jnp.pad(params['final_b'], ((0, 0), (0, dv))),
        'blocks_p': [],
    }
    for blk in params['blocks']:
        pp['blocks_p'].append({
            'w1': pad_conv(blk['w1']), 'b1': pad_vec(blk['b1']),
            'g1': pad_vec(blk['g1']), 'be1': pad_vec(blk['be1']),
            'w2': pad_conv(blk['w2']), 'b2': pad_vec(blk['b2']),
            'g2': pad_vec(blk['g2']), 'be2': pad_vec(blk['be2']),
            'ec1': blk['ec1'], 'ec2': blk['ec2'],
        })
    return pp


# ----------------------------------------------------------------------------
# Full NextItNet_Decoder forward (backward=False path).
# ----------------------------------------------------------------------------
def nextitnet_decoder_forward(pp, x_ids, s, task_num, mp, onecall=False):
    C, V = mp['dilated_channels'], mp['item_size']
    Cp = pp['Cp']

    inputs = pp['embedding_p'][x_ids]                       # glue: gather [B,S,Cp]

    masks_list, gates = [], []
    for blk in pp['blocks_p']:
        # glue: tiny [1, C] gate = sigmoid(s * Embedding(task))
        gc1 = jax.nn.sigmoid(s * blk['ec1'][task_num][None, :])
        gc2 = jax.nn.sigmoid(s * blk['ec2'][task_num][None, :])
        masks_list += [gc1, gc2]
        gates.append((jnp.pad(gc1, ((0, 0), (0, Cp - C))),
                      jnp.pad(gc2, ((0, 0), (0, Cp - C)))))

    out = residual_blocks(inputs, pp['blocks_p'], gates,
                          kernel_size=mp['kernel_size'],
                          dilations=tuple(mp['dilations']), true_c=C)

    if onecall:
        hidden = out[:, -1, :].reshape(-1, Cp)
    else:
        hidden = out.reshape(-1, Cp)

    logits_p = final_linear(hidden, pp['final_w_p'], pp['final_b_p'])
    logits = logits_p[:, :V]                                # drop lane padding
    return logits, masks_list


if __name__ == "__main__":
    model_para = {
        'item_size': 64,
        'dilated_channels': 32,
        'target_item_size': 16,
        'dilations': [1, 2],
        'kernel_size': 3,
        'task_embs': [0, 2],
    }
    B, S = 2, 16

    key = jax.random.PRNGKey(0)
    k_params, k_ids = jax.random.split(key)
    params = init_params(k_params, model_para)
    padded = pad_params(params, model_para)
    x_ids = jax.random.randint(k_ids, (B, S), 0, model_para['item_size'])
    s = jnp.float32(1.0)
    task_num = 1

    logits, masks = nextitnet_decoder_forward(padded, x_ids, s, task_num,
                                              model_para, onecall=False)
    jax.block_until_ready(logits)
    for m in masks:
        jax.block_until_ready(m)

    assert logits.shape == (B * S, model_para['item_size'])
    assert len(masks) == 2 * len(model_para['dilations'])
    print("KERNEL_OK")
</pallas_src>

<mosaic_0001>
module attributes {stable_mosaic.version = 11 : i64} {
  func.func @fused_blocks_kernel(%arg0: i32, %arg1: memref<1x16x128xf32, #tpu.memory_space<vmem>>, %arg2: memref<384x128xbf16, #tpu.memory_space<vmem>>, %arg3: memref<1x128xf32, #tpu.memory_space<vmem>>, %arg4: memref<1x128xf32, #tpu.memory_space<vmem>>, %arg5: memref<1x128xf32, #tpu.memory_space<vmem>>, %arg6: memref<384x128xbf16, #tpu.memory_space<vmem>>, %arg7: memref<1x128xf32, #tpu.memory_space<vmem>>, %arg8: memref<1x128xf32, #tpu.memory_space<vmem>>, %arg9: memref<1x128xf32, #tpu.memory_space<vmem>>, %arg10: memref<1x128xf32, #tpu.memory_space<vmem>>, %arg11: memref<1x128xf32, #tpu.memory_space<vmem>>, %arg12: memref<384x128xbf16, #tpu.memory_space<vmem>>, %arg13: memref<1x128xf32, #tpu.memory_space<vmem>>, %arg14: memref<1x128xf32, #tpu.memory_space<vmem>>, %arg15: memref<1x128xf32, #tpu.memory_space<vmem>>, %arg16: memref<384x128xbf16, #tpu.memory_space<vmem>>, %arg17: memref<1x128xf32, #tpu.memory_space<vmem>>, %arg18: memref<1x128xf32, #tpu.memory_space<vmem>>, %arg19: memref<1x128xf32, #tpu.memory_space<vmem>>, %arg20: memref<1x128xf32, #tpu.memory_space<vmem>>, %arg21: memref<1x128xf32, #tpu.memory_space<vmem>>, %arg22: memref<1x16x128xf32, #tpu.memory_space<vmem>>, %arg23: memref<16x384xbf16, #tpu.memory_space<vmem>>) attributes {dimension_semantics = [#tpu.dimension_semantics<parallel>], iteration_bounds = array<i64: 2>, scalar_prefetch = 0 : i64, scratch_operands = 1 : i64, tpu.core_type = #tpu.core_type<tc>, window_params = [{transform_indices = @transform_0, window_bounds = array<i64: 1, 16, 128>}, {pipeline_mode = #tpu.pipeline_mode<synchronous>, transform_indices = @transform_1, window_bounds = array<i64: 384, 128>}, {pipeline_mode = #tpu.pipeline_mode<synchronous>, transform_indices = @transform_2, window_bounds = array<i64: 1, 128>}, {pipeline_mode = #tpu.pipeline_mode<synchronous>, transform_indices = @transform_3, window_bounds = array<i64: 1, 128>}, {pipeline_mode = #tpu.pipeline_mode<synchronous>, transform_indices = @transform_4, window_bounds = array<i64: 1, 128>}, {pipeline_mode = #tpu.pipeline_mode<synchronous>, transform_indices = @transform_5, window_bounds = array<i64: 384, 128>}, {pipeline_mode = #tpu.pipeline_mode<synchronous>, transform_indices = @transform_6, window_bounds = array<i64: 1, 128>}, {pipeline_mode = #tpu.pipeline_mode<synchronous>, transform_indices = @transform_7, window_bounds = array<i64: 1, 128>}, {pipeline_mode = #tpu.pipeline_mode<synchronous>, transform_indices = @transform_8, window_bounds = array<i64: 1, 128>}, {pipeline_mode = #tpu.pipeline_mode<synchronous>, transform_indices = @transform_9, window_bounds = array<i64: 1, 128>}, {pipeline_mode = #tpu.pipeline_mode<synchronous>, transform_indices = @transform_10, window_bounds = array<i64: 1, 128>}, {pipeline_mode = #tpu.pipeline_mode<synchronous>, transform_indices = @transform_11, window_bounds = array<i64: 384, 128>}, {pipeline_mode = #tpu.pipeline_mode<synchronous>, transform_indices = @transform_12, window_bounds = array<i64: 1, 128>}, {pipeline_mode = #tpu.pipeline_mode<synchronous>, transform_indices = @transform_13, window_bounds = array<i64: 1, 128>}, {pipeline_mode = #tpu.pipeline_mode<synchronous>, transform_indices = @transform_14, window_bounds = array<i64: 1, 128>}, {pipeline_mode = #tpu.pipeline_mode<synchronous>, transform_indices = @transform_15, window_bounds = array<i64: 384, 128>}, {pipeline_mode = #tpu.pipeline_mode<synchronous>, transform_indices = @transform_16, window_bounds = array<i64: 1, 128>}, {pipeline_mode = #tpu.pipeline_mode<synchronous>, transform_indices = @transform_17, window_bounds = array<i64: 1, 128>}, {pipeline_mode = #tpu.pipeline_mode<synchronous>, transform_indices = @transform_18, window_bounds = array<i64: 1, 128>}, {pipeline_mode = #tpu.pipeline_mode<synchronous>, transform_indices = @transform_19, window_bounds = array<i64: 1, 128>}, {pipeline_mode = #tpu.pipeline_mode<synchronous>, transform_indices = @transform_20, window_bounds = array<i64: 1, 128>}, {transform_indices = @transform_21, window_bounds = array<i64: 1, 16, 128>}]} {
    %0 = tpu.iota {dimensions = array<i32: 1>} : vector<1x128xi32>
    %c32_i32 = arith.constant 32 : i32
    %1 = vector.broadcast %c32_i32 : i32 to vector<1x128xi32>
    %2 = arith.cmpi slt, %0, %1 : vector<1x128xi32>
    %3 = arith.extui %2 : vector<1x128xi1> to vector<1x128xi32>
    %4 = arith.sitofp %3 : vector<1x128xi32> to vector<1x128xf32>
    %c0 = arith.constant 0 : index
    %c0_0 = arith.constant 0 : index
    %c0_1 = arith.constant 0 : index
    %5 = vector.load %arg1[%c0, %c0_0, %c0_1] : memref<1x16x128xf32, #tpu.memory_space<vmem>>, vector<1x16x128xf32>
    %6 = vector.shape_cast %5 : vector<1x16x128xf32> to vector<16x128xf32>
    %7 = arith.truncf %6 : vector<16x128xf32> to vector<16x128xbf16>
    %cst = arith.constant 0.000000e+00 : bf16
    %8 = vector.broadcast %cst : bf16 to vector<2x384xbf16>
    %c0_2 = arith.constant 0 : index
    %c0_3 = arith.constant 0 : index
    %9 = vector.load %arg23[%c0_2, %c0_3] : memref<16x384xbf16, #tpu.memory_space<vmem>>, vector<2x384xbf16>
    tpu.vector_store %arg23[%c0_2, %c0_3], %8 {strides = array<i32>} : memref<16x384xbf16, #tpu.memory_space<vmem>>, vector<2x384xbf16>,
    %10 = vector.extract_strided_slice %7 {offsets = [0, 0], sizes = [14, 128], strides = [1, 1]} : vector<16x128xbf16> to vector<14x128xbf16>
    %c2 = arith.constant 2 : index
    %c0_4 = arith.constant 0 : index
    %11 = vector.load %arg23[%c2, %c0_4] : memref<16x384xbf16, #tpu.memory_space<vmem>>, vector<14x128xbf16>
    tpu.vector_store %arg23[%c2, %c0_4], %10 {strides = array<i32>} : memref<16x384xbf16, #tpu.memory_space<vmem>>, vector<14x128xbf16>,
    %12 = vector.extract_strided_slice %7 {offsets = [0, 0], sizes = [15, 128], strides = [1, 1]} : vector<16x128xbf16> to vector<15x128xbf16>
    %c1 = arith.constant 1 : index
    %c128 = arith.constant 128 : index
    %13 = vector.load %arg23[%c1, %c128] : memref<16x384xbf16, #tpu.memory_space<vmem>>, vector<15x128xbf16>
    tpu.vector_store %arg23[%c1, %c128], %12 {strides = array<i32>} : memref<16x384xbf16, #tpu.memory_space<vmem>>, vector<15x128xbf16>,
    %c0_5 = arith.constant 0 : index
    %c256 = arith.constant 256 : index
    %14 = vector.load %arg23[%c0_5, %c256] : memref<16x384xbf16, #tpu.memory_space<vmem>>, vector<16x128xbf16>
    tpu.vector_store %arg23[%c0_5, %c256], %7 {strides = array<i32>} : memref<16x384xbf16, #tpu.memory_space<vmem>>, vector<16x128xbf16>,
    %c0_6 = arith.constant 0 : index
    %c0_7 = arith.constant 0 : index
    %15 = vector.load %arg23[%c0_6, %c0_7] : memref<16x384xbf16, #tpu.memory_space<vmem>>, vector<16x384xbf16>
    %c0_8 = arith.constant 0 : index
    %c0_9 = arith.constant 0 : index
    %16 = vector.load %arg2[%c0_8, %c0_9] : memref<384x128xbf16, #tpu.memory_space<vmem>>, vector<384x128xbf16>
    %cst_10 = arith.constant dense<0.000000e+00> : vector<16x128xf32>
    %17 = tpu.matmul %15, %16, %cst_10 {dimension_numbers = #tpu.dot_dimension_numbers<[1], [0], [0], [1], [0, 0, 1, 1], [], []>} : vector<16x384xbf16>, vector<384x128xbf16>, vector<16x128xf32> -> vector<16x128xf32>
    %c0_11 = arith.constant 0 : index
    %c0_12 = arith.constant 0 : index
    %18 = vector.load %arg3[%c0_11, %c0_12] : memref<1x128xf32, #tpu.memory_space<vmem>>, vector<1x128xf32>
    %19 = vector.broadcast %18 : vector<1x128xf32> to vector<16x128xf32>
    %20 = arith.addf %17, %19 : vector<16x128xf32>
    %c0_13 = arith.constant 0 : index
    %c0_14 = arith.constant 0 : index
    %21 = vector.load %arg4[%c0_13, %c0_14] : memref<1x128xf32, #tpu.memory_space<vmem>>, vector<1x128xf32>
    %c0_15 = arith.constant 0 : index
    %c0_16 = arith.constant 0 : index
    %22 = vector.load %arg5[%c0_15, %c0_16] : memref<1x128xf32, #tpu.memory_space<vmem>>, vector<1x128xf32>
    %cst_17 = arith.constant dense<0.000000e+00> : vector<16xf32>
    %23 = vector.multi_reduction <add>, %20, %cst_17 [1] : vector<16x128xf32> to vector<16xf32>
    %24 = vector.shape_cast %23 : vector<16xf32> to vector<16x1xf32>
    %cst_18 = arith.constant 3.125000e-02 : f32
    %25 = vector.broadcast %cst_18 : f32 to vector<16x1xf32>
    %26 = arith.mulf %24, %25 : vector<16x1xf32>
    %27 = vector.broadcast %26 : vector<16x1xf32> to vector<16x128xf32>
    %28 = arith.subf %20, %27 : vector<16x128xf32>
    %29 = vector.broadcast %4 : vector<1x128xf32> to vector<16x128xf32>
    %30 = arith.mulf %28, %29 : vector<16x128xf32>
    %31 = arith.mulf %30, %30 : vector<16x128xf32>
    %cst_19 = arith.constant dense<0.000000e+00> : vector<16xf32>
    %32 = vector.multi_reduction <add>, %31, %cst_19 [1] : vector<16x128xf32> to vector<16xf32>
    %33 = vector.shape_cast %32 : vector<16xf32> to vector<16x1xf32>
    %cst_20 = arith.constant 3.125000e-02 : f32
    %34 = vector.broadcast %cst_20 : f32 to vector<16x1xf32>
    %35 = arith.mulf %33, %34 : vector<16x1xf32>
    %cst_21 = arith.constant 9.99999993E-9 : f32
    %36 = vector.broadcast %cst_21 : f32 to vector<16x1xf32>
    %37 = arith.addf %35, %36 : vector<16x1xf32>
    %38 = math.rsqrt %37 : vector<16x1xf32>
    %39 = vector.broadcast %38 : vector<16x1xf32> to vector<16x128xf32>
    %40 = arith.mulf %30, %39 : vector<16x128xf32>
    %41 = vector.broadcast %21 : vector<1x128xf32> to vector<16x128xf32>
    %42 = arith.mulf %40, %41 : vector<16x128xf32>
    %43 = vector.broadcast %22 : vector<1x128xf32> to vector<16x128xf32>
    %44 = arith.addf %42, %43 : vector<16x128xf32>
    %cst_22 = arith.constant 0.000000e+00 : f32
    %45 = vector.broadcast %cst_22 : f32 to vector<16x128xf32>
    %46 = arith.maximumf %44, %45 : vector<16x128xf32>
    %c0_23 = arith.constant 0 : index
    %c0_24 = arith.constant 0 : index
    %47 = vector.load %arg10[%c0_23, %c0_24] : memref<1x128xf32, #tpu.memory_space<vmem>>, vector<1x128xf32>
    %48 = vector.broadcast %47 : vector<1x128xf32> to vector<16x128xf32>
    %49 = arith.mulf %46, %48 : vector<16x128xf32>
    %50 = arith.truncf %49 : vector<16x128xf32> to vector<16x128xbf16>
    %cst_25 = arith.constant 0.000000e+00 : bf16
    %51 = vector.broadcast %cst_25 : bf16 to vector<4x384xbf16>
    %c0_26 = arith.constant 0 : index
    %c0_27 = arith.constant 0 : index
    %52 = vector.load %arg23[%c0_26, %c0_27] : memref<16x384xbf16, #tpu.memory_space<vmem>>, vector<4x384xbf16>
    tpu.vector_store %arg23[%c0_26, %c0_27], %51 {strides = array<i32>} : memref<16x384xbf16, #tpu.memory_space<vmem>>, vector<4x384xbf16>,
    %53 = vector.extract_strided_slice %50 {offsets = [0, 0], sizes = [12, 128], strides = [1, 1]} : vector<16x128xbf16> to vector<12x128xbf16>
    %c4 = arith.constant 4 : index
    %c0_28 = arith.constant 0 : index
    %54 = vector.load %arg23[%c4, %c0_28] : memref<16x384xbf16, #tpu.memory_space<vmem>>, vector<12x128xbf16>
    tpu.vector_store %arg23[%c4, %c0_28], %53 {strides = array<i32>} : memref<16x384xbf16, #tpu.memory_space<vmem>>, vector<12x128xbf16>,
    %55 = vector.extract_strided_slice %50 {offsets = [0, 0], sizes = [14, 128], strides = [1, 1]} : vector<16x128xbf16> to vector<14x128xbf16>
    %c2_29 = arith.constant 2 : index
    %c128_30 = arith.constant 128 : index
    %56 = vector.load %arg23[%c2_29, %c128_30] : memref<16x384xbf16, #tpu.memory_space<vmem>>, vector<14x128xbf16>
    tpu.vector_store %arg23[%c2_29, %c128_30], %55 {strides = array<i32>} : memref<16x384xbf16, #tpu.memory_space<vmem>>, vector<14x128xbf16>,
    %c0_31 = arith.constant 0 : index
    %c256_32 = arith.constant 256 : index
    %57 = vector.load %arg23[%c0_31, %c256_32] : memref<16x384xbf16, #tpu.memory_space<vmem>>, vector<16x128xbf16>
    tpu.vector_store %arg23[%c0_31, %c256_32], %50 {strides = array<i32>} : memref<16x384xbf16, #tpu.memory_space<vmem>>, vector<16x128xbf16>,
    %c0_33 = arith.constant 0 : index
    %c0_34 = arith.constant 0 : index
    %58 = vector.load %arg23[%c0_33, %c0_34] : memref<16x384xbf16, #tpu.memory_space<vmem>>, vector<16x384xbf16>
    %c0_35 = arith.constant 0 : index
    %c0_36 = arith.constant 0 : index
    %59 = vector.load %arg6[%c0_35, %c0_36] : memref<384x128xbf16, #tpu.memory_space<vmem>>, vector<384x128xbf16>
    %cst_37 = arith.constant dense<0.000000e+00> : vector<16x128xf32>
    %60 = tpu.matmul %58, %59, %cst_37 {dimension_numbers = #tpu.dot_dimension_numbers<[1], [0], [0], [1], [0, 0, 1, 1], [], []>} : vector<16x384xbf16>, vector<384x128xbf16>, vector<16x128xf32> -> vector<16x128xf32>
    %c0_38 = arith.constant 0 : index
    %c0_39 = arith.constant 0 : index
    %61 = vector.load %arg7[%c0_38, %c0_39] : memref<1x128xf32, #tpu.memory_space<vmem>>, vector<1x128xf32>
    %62 = vector.broadcast %61 : vector<1x128xf32> to vector<16x128xf32>
    %63 = arith.addf %60, %62 : vector<16x128xf32>
    %c0_40 = arith.constant 0 : index
    %c0_41 = arith.constant 0 : index
    %64 = vector.load %arg8[%c0_40, %c0_41] : memref<1x128xf32, #tpu.memory_space<vmem>>, vector<1x128xf32>
    %c0_42 = arith.constant 0 : index
    %c0_43 = arith.constant 0 : index
    %65 = vector.load %arg9[%c0_42, %c0_43] : memref<1x128xf32, #tpu.memory_space<vmem>>, vector<1x128xf32>
    %cst_44 = arith.constant dense<0.000000e+00> : vector<16xf32>
    %66 = vector.multi_reduction <add>, %63, %cst_44 [1] : vector<16x128xf32> to vector<16xf32>
    %67 = vector.shape_cast %66 : vector<16xf32> to vector<16x1xf32>
    %cst_45 = arith.constant 3.125000e-02 : f32
    %68 = vector.broadcast %cst_45 : f32 to vector<16x1xf32>
    %69 = arith.mulf %67, %68 : vector<16x1xf32>
    %70 = vector.broadcast %69 : vector<16x1xf32> to vector<16x128xf32>
    %71 = arith.subf %63, %70 : vector<16x128xf32>
    %72 = vector.broadcast %4 : vector<1x128xf32> to vector<16x128xf32>
    %73 = arith.mulf %71, %72 : vector<16x128xf32>
    %74 = arith.mulf %73, %73 : vector<16x128xf32>
    %cst_46 = arith.constant dense<0.000000e+00> : vector<16xf32>
    %75 = vector.multi_reduction <add>, %74, %cst_46 [1] : vector<16x128xf32> to vector<16xf32>
    %76 = vector.shape_cast %75 : vector<16xf32> to vector<16x1xf32>
    %cst_47 = arith.constant 3.125000e-02 : f32
    %77 = vector.broadcast %cst_47 : f32 to vector<16x1xf32>
    %78 = arith.mulf %76, %77 : vector<16x1xf32>
    %cst_48 = arith.constant 9.99999993E-9 : f32
    %79 = vector.broadcast %cst_48 : f32 to vector<16x1xf32>
    %80 = arith.addf %78, %79 : vector<16x1xf32>
    %81 = math.rsqrt %80 : vector<16x1xf32>
    %82 = vector.broadcast %81 : vector<16x1xf32> to vector<16x128xf32>
    %83 = arith.mulf %73, %82 : vector<16x128xf32>
    %84 = vector.broadcast %64 : vector<1x128xf32> to vector<16x128xf32>
    %85 = arith.mulf %83, %84 : vector<16x128xf32>
    %86 = vector.broadcast %65 : vector<1x128xf32> to vector<16x128xf32>
    %87 = arith.addf %85, %86 : vector<16x128xf32>
    %cst_49 = arith.constant 0.000000e+00 : f32
    %88 = vector.broadcast %cst_49 : f32 to vector<16x128xf32>
    %89 = arith.maximumf %87, %88 : vector<16x128xf32>
    %c0_50 = arith.constant 0 : index
    %c0_51 = arith.constant 0 : index
    %90 = vector.load %arg11[%c0_50, %c0_51] : memref<1x128xf32, #tpu.memory_space<vmem>>, vector<1x128xf32>
    %91 = vector.broadcast %90 : vector<1x128xf32> to vector<16x128xf32>
    %92 = arith.mulf %89, %91 : vector<16x128xf32>
    %93 = arith.addf %6, %92 : vector<16x128xf32>
    %94 = arith.truncf %93 : vector<16x128xf32> to vector<16x128xbf16>
    %cst_52 = arith.constant 0.000000e+00 : bf16
    %95 = vector.broadcast %cst_52 : bf16 to vector<4x384xbf16>
    %c0_53 = arith.constant 0 : index
    %c0_54 = arith.constant 0 : index
    %96 = vector.load %arg23[%c0_53, %c0_54] : memref<16x384xbf16, #tpu.memory_space<vmem>>, vector<4x384xbf16>
    tpu.vector_store %arg23[%c0_53, %c0_54], %95 {strides = array<i32>} : memref<16x384xbf16, #tpu.memory_space<vmem>>, vector<4x384xbf16>,
    %97 = vector.extract_strided_slice %94 {offsets = [0, 0], sizes = [12, 128], strides = [1, 1]} : vector<16x128xbf16> to vector<12x128xbf16>
    %c4_55 = arith.constant 4 : index
    %c0_56 = arith.constant 0 : index
    %98 = vector.load %arg23[%c4_55, %c0_56] : memref<16x384xbf16, #tpu.memory_space<vmem>>, vector<12x128xbf16>
    tpu.vector_store %arg23[%c4_55, %c0_56], %97 {strides = array<i32>} : memref<16x384xbf16, #tpu.memory_space<vmem>>, vector<12x128xbf16>,
    %99 = vector.extract_strided_slice %94 {offsets = [0, 0], sizes = [14, 128], strides = [1, 1]} : vector<16x128xbf16> to vector<14x128xbf16>
    %c2_57 = arith.constant 2 : index
    %c128_58 = arith.constant 128 : index
    %100 = vector.load %arg23[%c2_57, %c128_58] : memref<16x384xbf16, #tpu.memory_space<vmem>>, vector<14x128xbf16>
    tpu.vector_store %arg23[%c2_57, %c128_58], %99 {strides = array<i32>} : memref<16x384xbf16, #tpu.memory_space<vmem>>, vector<14x128xbf16>,
    %c0_59 = arith.constant 0 : index
    %c256_60 = arith.constant 256 : index
    %101 = vector.load %arg23[%c0_59, %c256_60] : memref<16x384xbf16, #tpu.memory_space<vmem>>, vector<16x128xbf16>
    tpu.vector_store %arg23[%c0_59, %c256_60], %94 {strides = array<i32>} : memref<16x384xbf16, #tpu.memory_space<vmem>>, vector<16x128xbf16>,
    %c0_61 = arith.constant 0 : index
    %c0_62 = arith.constant 0 : index
    %102 = vector.load %arg23[%c0_61, %c0_62] : memref<16x384xbf16, #tpu.memory_space<vmem>>, vector<16x384xbf16>
    %c0_63 = arith.constant 0 : index
    %c0_64 = arith.constant 0 : index
    %103 = vector.load %arg12[%c0_63, %c0_64] : memref<384x128xbf16, #tpu.memory_space<vmem>>, vector<384x128xbf16>
    %cst_65 = arith.constant dense<0.000000e+00> : vector<16x128xf32>
    %104 = tpu.matmul %102, %103, %cst_65 {dimension_numbers = #tpu.dot_dimension_numbers<[1], [0], [0], [1], [0, 0, 1, 1], [], []>} : vector<16x384xbf16>, vector<384x128xbf16>, vector<16x128xf32> -> vector<16x128xf32>
    %c0_66 = arith.constant 0 : index
    %c0_67 = arith.constant 0 : index
    %105 = vector.load %arg13[%c0_66, %c0_67] : memref<1x128xf32, #tpu.memory_space<vmem>>, vector<1x128xf32>
    %106 = vector.broadcast %105 : vector<1x128xf32> to vector<16x128xf32>
    %107 = arith.addf %104, %106 : vector<16x128xf32>
    %c0_68 = arith.constant 0 : index
    %c0_69 = arith.constant 0 : index
    %108 = vector.load %arg14[%c0_68, %c0_69] : memref<1x128xf32, #tpu.memory_space<vmem>>, vector<1x128xf32>
    %c0_70 = arith.constant 0 : index
    %c0_71 = arith.constant 0 : index
    %109 = vector.load %arg15[%c0_70, %c0_71] : memref<1x128xf32, #tpu.memory_space<vmem>>, vector<1x128xf32>
    %cst_72 = arith.constant dense<0.000000e+00> : vector<16xf32>
    %110 = vector.multi_reduction <add>, %107, %cst_72 [1] : vector<16x128xf32> to vector<16xf32>
    %111 = vector.shape_cast %110 : vector<16xf32> to vector<16x1xf32>
    %cst_73 = arith.constant 3.125000e-02 : f32
    %112 = vector.broadcast %cst_73 : f32 to vector<16x1xf32>
    %113 = arith.mulf %111, %112 : vector<16x1xf32>
    %114 = vector.broadcast %113 : vector<16x1xf32> to vector<16x128xf32>
    %115 = arith.subf %107, %114 : vector<16x128xf32>
    %116 = vector.broadcast %4 : vector<1x128xf32> to vector<16x128xf32>
    %117 = arith.mulf %115, %116 : vector<16x128xf32>
    %118 = arith.mulf %117, %117 : vector<16x128xf32>
    %cst_74 = arith.constant dense<0.000000e+00> : vector<16xf32>
    %119 = vector.multi_reduction <add>, %118, %cst_74 [1] : vector<16x128xf32> to vector<16xf32>
    %120 = vector.shape_cast %119 : vector<16xf32> to vector<16x1xf32>
    %cst_75 = arith.constant 3.125000e-02 : f32
    %121 = vector.broadcast %cst_75 : f32 to vector<16x1xf32>
    %122 = arith.mulf %120, %121 : vector<16x1xf32>
    %cst_76 = arith.constant 9.99999993E-9 : f32
    %123 = vector.broadcast %cst_76 : f32 to vector<16x1xf32>
    %124 = arith.addf %122, %123 : vector<16x1xf32>
    %125 = math.rsqrt %124 : vector<16x1xf32>
    %126 = vector.broadcast %125 : vector<16x1xf32> to vector<16x128xf32>
    %127 = arith.mulf %117, %126 : vector<16x128xf32>
    %128 = vector.broadcast %108 : vector<1x128xf32> to vector<16x128xf32>
    %129 = arith.mulf %127, %128 : vector<16x128xf32>
    %130 = vector.broadcast %109 : vector<1x128xf32> to vector<16x128xf32>
    %131 = arith.addf %129, %130 : vector<16x128xf32>
    %cst_77 = arith.constant 0.000000e+00 : f32
    %132 = vector.broadcast %cst_77 : f32 to vector<16x128xf32>
    %133 = arith.maximumf %131, %132 : vector<16x128xf32>
    %c0_78 = arith.constant 0 : index
    %c0_79 = arith.constant 0 : index
    %134 = vector.load %arg20[%c0_78, %c0_79] : memref<1x128xf32, #tpu.memory_space<vmem>>, vector<1x128xf32>
    %135 = vector.broadcast %134 : vector<1x128xf32> to vector<16x128xf32>
    %136 = arith.mulf %133, %135 : vector<16x128xf32>
    %137 = arith.truncf %136 : vector<16x128xf32> to vector<16x128xbf16>
    %cst_80 = arith.constant 0.000000e+00 : bf16
    %138 = vector.broadcast %cst_80 : bf16 to vector<8x384xbf16>
    %c0_81 = arith.constant 0 : index
    %c0_82 = arith.constant 0 : index
    %139 = vector.load %arg23[%c0_81, %c0_82] : memref<16x384xbf16, #tpu.memory_space<vmem>>, vector<8x384xbf16>
    tpu.vector_store %arg23[%c0_81, %c0_82], %138 {strides = array<i32>} : memref<16x384xbf16, #tpu.memory_space<vmem>>, vector<8x384xbf16>,
    %140 = vector.extract_strided_slice %137 {offsets = [0, 0], sizes = [8, 128], strides = [1, 1]} : vector<16x128xbf16> to vector<8x128xbf16>
    %c8 = arith.constant 8 : index
    %c0_83 = arith.constant 0 : index
    %141 = vector.load %arg23[%c8, %c0_83] : memref<16x384xbf16, #tpu.memory_space<vmem>>, vector<8x128xbf16>
    tpu.vector_store %arg23[%c8, %c0_83], %140 {strides = array<i32>} : memref<16x384xbf16, #tpu.memory_space<vmem>>, vector<8x128xbf16>,
    %142 = vector.extract_strided_slice %137 {offsets = [0, 0], sizes = [12, 128], strides = [1, 1]} : vector<16x128xbf16> to vector<12x128xbf16>
    %c4_84 = arith.constant 4 : index
    %c128_85 = arith.constant 128 : index
    %143 = vector.load %arg23[%c4_84, %c128_85] : memref<16x384xbf16, #tpu.memory_space<vmem>>, vector<12x128xbf16>
    tpu.vector_store %arg23[%c4_84, %c128_85], %142 {strides = array<i32>} : memref<16x384xbf16, #tpu.memory_space<vmem>>, vector<12x128xbf16>,
    %c0_86 = arith.constant 0 : index
    %c256_87 = arith.constant 256 : index
    %144 = vector.load %arg23[%c0_86, %c256_87] : memref<16x384xbf16, #tpu.memory_space<vmem>>, vector<16x128xbf16>
    tpu.vector_store %arg23[%c0_86, %c256_87], %137 {strides = array<i32>} : memref<16x384xbf16, #tpu.memory_space<vmem>>, vector<16x128xbf16>,
    %c0_88 = arith.constant 0 : index
    %c0_89 = arith.constant 0 : index
    %145 = vector.load %arg23[%c0_88, %c0_89] : memref<16x384xbf16, #tpu.memory_space<vmem>>, vector<16x384xbf16>
    %c0_90 = arith.constant 0 : index
    %c0_91 = arith.constant 0 : index
    %146 = vector.load %arg16[%c0_90, %c0_91] : memref<384x128xbf16, #tpu.memory_space<vmem>>, vector<384x128xbf16>
    %cst_92 = arith.constant dense<0.000000e+00> : vector<16x128xf32>
    %147 = tpu.matmul %145, %146, %cst_92 {dimension_numbers = #tpu.dot_dimension_numbers<[1], [0], [0], [1], [0, 0, 1, 1], [], []>} : vector<16x384xbf16>, vector<384x128xbf16>, vector<16x128xf32> -> vector<16x128xf32>
    %c0_93 = arith.constant 0 : index
    %c0_94 = arith.constant 0 : index
    %148 = vector.load %arg17[%c0_93, %c0_94] : memref<1x128xf32, #tpu.memory_space<vmem>>, vector<1x128xf32>
    %149 = vector.broadcast %148 : vector<1x128xf32> to vector<16x128xf32>
    %150 = arith.addf %147, %149 : vector<16x128xf32>
    %c0_95 = arith.constant 0 : index
    %c0_96 = arith.constant 0 : index
    %151 = vector.load %arg18[%c0_95, %c0_96] : memref<1x128xf32, #tpu.memory_space<vmem>>, vector<1x128xf32>
    %c0_97 = arith.constant 0 : index
    %c0_98 = arith.constant 0 : index
    %152 = vector.load %arg19[%c0_97, %c0_98] : memref<1x128xf32, #tpu.memory_space<vmem>>, vector<1x128xf32>
    %cst_99 = arith.constant dense<0.000000e+00> : vector<16xf32>
    %153 = vector.multi_reduction <add>, %150, %cst_99 [1] : vector<16x128xf32> to vector<16xf32>
    %154 = vector.shape_cast %153 : vector<16xf32> to vector<16x1xf32>
    %cst_100 = arith.constant 3.125000e-02 : f32
    %155 = vector.broadcast %cst_100 : f32 to vector<16x1xf32>
    %156 = arith.mulf %154, %155 : vector<16x1xf32>
    %157 = vector.broadcast %156 : vector<16x1xf32> to vector<16x128xf32>
    %158 = arith.subf %150, %157 : vector<16x128xf32>
    %159 = vector.broadcast %4 : vector<1x128xf32> to vector<16x128xf32>
    %160 = arith.mulf %158, %159 : vector<16x128xf32>
    %161 = arith.mulf %160, %160 : vector<16x128xf32>
    %cst_101 = arith.constant dense<0.000000e+00> : vector<16xf32>
    %162 = vector.multi_reduction <add>, %161, %cst_101 [1] : vector<16x128xf32> to vector<16xf32>
    %163 = vector.shape_cast %162 : vector<16xf32> to vector<16x1xf32>
    %cst_102 = arith.constant 3.125000e-02 : f32
    %164 = vector.broadcast %cst_102 : f32 to vector<16x1xf32>
    %165 = arith.mulf %163, %164 : vector<16x1xf32>
    %cst_103 = arith.constant 9.99999993E-9 : f32
    %166 = vector.broadcast %cst_103 : f32 to vector<16x1xf32>
    %167 = arith.addf %165, %166 : vector<16x1xf32>
    %168 = math.rsqrt %167 : vector<16x1xf32>
    %169 = vector.broadcast %168 : vector<16x1xf32> to vector<16x128xf32>
    %170 = arith.mulf %160, %169 : vector<16x128xf32>
    %171 = vector.broadcast %151 : vector<1x128xf32> to vector<16x128xf32>
    %172 = arith.mulf %170, %171 : vector<16x128xf32>
    %173 = vector.broadcast %152 : vector<1x128xf32> to vector<16x128xf32>
    %174 = arith.addf %172, %173 : vector<16x128xf32>
    %cst_104 = arith.constant 0.000000e+00 : f32
    %175 = vector.broadcast %cst_104 : f32 to vector<16x128xf32>
    %176 = arith.maximumf %174, %175 : vector<16x128xf32>
    %c0_105 = arith.constant 0 : index
    %c0_106 = arith.constant 0 : index
    %177 = vector.load %arg21[%c0_105, %c0_106] : memref<1x128xf32, #tpu.memory_space<vmem>>, vector<1x128xf32>
    %178 = vector.broadcast %177 : vector<1x128xf32> to vector<16x128xf32>
    %179 = arith.mulf %176, %178 : vector<16x128xf32>
    %180 = arith.addf %93, %179 : vector<16x128xf32>
    %181 = vector.shape_cast %180 : vector<16x128xf32> to vector<1x16x128xf32>
    %c0_107 = arith.constant 0 : index
    %c0_108 = arith.constant 0 : index
    %c0_109 = arith.constant 0 : index
    %182 = vector.load %arg22[%c0_107, %c0_108, %c0_109] : memref<1x16x128xf32, #tpu.memory_space<vmem>>, vector<1x16x128xf32>
    tpu.vector_store %arg22[%c0_107, %c0_108, %c0_109], %181 {strides = array<i32>} : memref<1x16x128xf32, #tpu.memory_space<vmem>>, vector<1x16x128xf32>,
    return
  }
  func.func @transform_0(%arg0: i32) -> (i32, i32, i32) {
    %c0_i32 = arith.constant 0 : i32
    %c0_i32_0 = arith.constant 0 : i32
    %c0_i32_1 = arith.constant 0 : i32
    return %arg0, %c0_i32, %c0_i32_0 : i32, i32, i32
  }
  func.func @transform_1(%arg0: i32) -> (i32, i32) {
    %c0_i32 = arith.constant 0 : i32
    %c0_i32_0 = arith.constant 0 : i32
    %c0_i32_1 = arith.constant 0 : i32
    return %c0_i32, %c0_i32_0 : i32, i32
  }
  func.func @transform_2(%arg0: i32) -> (i32, i32) {
    %c0_i32 = arith.constant 0 : i32
    %c0_i32_0 = arith.constant 0 : i32
    %c0_i32_1 = arith.constant 0 : i32
    return %c0_i32, %c0_i32_0 : i32, i32
  }
  func.func @transform_3(%arg0: i32) -> (i32, i32) {
    %c0_i32 = arith.constant 0 : i32
    %c0_i32_0 = arith.constant 0 : i32
    %c0_i32_1 = arith.constant 0 : i32
    return %c0_i32, %c0_i32_0 : i32, i32
  }
  func.func @transform_4(%arg0: i32) -> (i32, i32) {
    %c0_i32 = arith.constant 0 : i32
    %c0_i32_0 = arith.constant 0 : i32
    %c0_i32_1 = arith.constant 0 : i32
    return %c0_i32, %c0_i32_0 : i32, i32
  }
  func.func @transform_5(%arg0: i32) -> (i32, i32) {
    %c0_i32 = arith.constant 0 : i32
    %c0_i32_0 = arith.constant 0 : i32
    %c0_i32_1 = arith.constant 0 : i32
    return %c0_i32, %c0_i32_0 : i32, i32
  }
  func.func @transform_6(%arg0: i32) -> (i32, i32) {
    %c0_i32 = arith.constant 0 : i32
    %c0_i32_0 = arith.constant 0 : i32
    %c0_i32_1 = arith.constant 0 : i32
    return %c0_i32, %c0_i32_0 : i32, i32
  }
  func.func @transform_7(%arg0: i32) -> (i32, i32) {
    %c0_i32 = arith.constant 0 : i32
    %c0_i32_0 = arith.constant 0 : i32
    %c0_i32_1 = arith.constant 0 : i32
    return %c0_i32, %c0_i32_0 : i32, i32
  }
  func.func @transform_8(%arg0: i32) -> (i32, i32) {
    %c0_i32 = arith.constant 0 : i32
    %c0_i32_0 = arith.constant 0 : i32
    %c0_i32_1 = arith.constant 0 : i32
    return %c0_i32, %c0_i32_0 : i32, i32
  }
  func.func @transform_9(%arg0: i32) -> (i32, i32) {
    %c0_i32 = arith.constant 0 : i32
    %c0_i32_0 = arith.constant 0 : i32
    %c0_i32_1 = arith.constant 0 : i32
    return %c0_i32, %c0_i32_0 : i32, i32
  }
  func.func @transform_10(%arg0: i32) -> (i32, i32) {
    %c0_i32 = arith.constant 0 : i32
    %c0_i32_0 = arith.constant 0 : i32
    %c0_i32_1 = arith.constant 0 : i32
    return %c0_i32, %c0_i32_0 : i32, i32
  }
  func.func @transform_11(%arg0: i32) -> (i32, i32) {
    %c0_i32 = arith.constant 0 : i32
    %c0_i32_0 = arith.constant 0 : i32
    %c0_i32_1 = arith.constant 0 : i32
    return %c0_i32, %c0_i32_0 : i32, i32
  }
  func.func @transform_12(%arg0: i32) -> (i32, i32) {
    %c0_i32 = arith.constant 0 : i32
    %c0_i32_0 = arith.constant 0 : i32
    %c0_i32_1 = arith.constant 0 : i32
    return %c0_i32, %c0_i32_0 : i32, i32
  }
  func.func @transform_13(%arg0: i32) -> (i32, i32) {
    %c0_i32 = arith.constant 0 : i32
    %c0_i32_0 = arith.constant 0 : i32
    %c0_i32_1 = arith.constant 0 : i32
    return %c0_i32, %c0_i32_0 : i32, i32
  }
  func.func @transform_14(%arg0: i32) -> (i32, i32) {
    %c0_i32 = arith.constant 0 : i32
    %c0_i32_0 = arith.constant 0 : i32
    %c0_i32_1 = arith.constant 0 : i32
    return %c0_i32, %c0_i32_0 : i32, i32
  }
  func.func @transform_15(%arg0: i32) -> (i32, i32) {
    %c0_i32 = arith.constant 0 : i32
    %c0_i32_0 = arith.constant 0 : i32
    %c0_i32_1 = arith.constant 0 : i32
    return %c0_i32, %c0_i32_0 : i32, i32
  }
  func.func @transform_16(%arg0: i32) -> (i32, i32) {
    %c0_i32 = arith.constant 0 : i32
    %c0_i32_0 = arith.constant 0 : i32
    %c0_i32_1 = arith.constant 0 : i32
    return %c0_i32, %c0_i32_0 : i32, i32
  }
  func.func @transform_17(%arg0: i32) -> (i32, i32) {
    %c0_i32 = arith.constant 0 : i32
    %c0_i32_0 = arith.constant 0 : i32
    %c0_i32_1 = arith.constant 0 : i32
    return %c0_i32, %c0_i32_0 : i32, i32
  }
  func.func @transform_18(%arg0: i32) -> (i32, i32) {
    %c0_i32 = arith.constant 0 : i32
    %c0_i32_0 = arith.constant 0 : i32
    %c0_i32_1 = arith.constant 0 : i32
    return %c0_i32, %c0_i32_0 : i32, i32
  }
  func.func @transform_19(%arg0: i32) -> (i32, i32) {
    %c0_i32 = arith.constant 0 : i32
    %c0_i32_0 = arith.constant 0 : i32
    %c0_i32_1 = arith.constant 0 : i32
    return %c0_i32, %c0_i32_0 : i32, i32
  }
  func.func @transform_20(%arg0: i32) -> (i32, i32) {
    %c0_i32 = arith.constant 0 : i32
    %c0_i32_0 = arith.constant 0 : i32
    %c0_i32_1 = arith.constant 0 : i32
    return %c0_i32, %c0_i32_0 : i32, i32
  }
  func.func @transform_21(%arg0: i32) -> (i32, i32, i32) {
    %c0_i32 = arith.constant 0 : i32
    %c0_i32_0 = arith.constant 0 : i32
    %c0_i32_1 = arith.constant 0 : i32
    return %arg0, %c0_i32, %c0_i32_0 : i32, i32, i32
  }
}

</mosaic_0001>

<llo_original>
// kernel: tpu_custom_call.1
$region0: #{tpu_custom_call.1}
  #allocation0 [shape = 'u32[]', space=smem, size = 0x4, offset = 0x4, fixed_abs, tag = 'smem constant byte address 0x4 - core index']
  #allocation1 [shape = 'u32[144,128]{1,0:T(1,128)}', space=vmem, size = 0x12000, scoped, tag = 'internal scratch']
  #allocation2 [shape = 'bf16[16,384]{1,0:T(16,128)(2,1)}', space=vmem, size = 0x3000, scoped, tag = 'scratch operand']
  %s0 = inlined_call_operand.hbm [shape: f32[2,16,128], index: 0, kind: input, shape index: {}]
  %s1 = inlined_call_operand.hbm [shape: bf16[384,128], index: 1, kind: input, shape index: {}]
  %s2 = inlined_call_operand.vmem [shape: f32[1,128], index: 2, kind: input, shape index: {}]
  %s3 = inlined_call_operand.vmem [shape: f32[1,128], index: 3, kind: input, shape index: {}]
  %s4 = inlined_call_operand.vmem [shape: f32[1,128], index: 4, kind: input, shape index: {}]
  %s5 = inlined_call_operand.hbm [shape: bf16[384,128], index: 5, kind: input, shape index: {}]
  %s6 = inlined_call_operand.vmem [shape: f32[1,128], index: 6, kind: input, shape index: {}]
  %s7 = inlined_call_operand.vmem [shape: f32[1,128], index: 7, kind: input, shape index: {}]
  %s8 = inlined_call_operand.vmem [shape: f32[1,128], index: 8, kind: input, shape index: {}]
  %s9 = inlined_call_operand.vmem [shape: f32[1,128], index: 9, kind: input, shape index: {}]
  %s10 = inlined_call_operand.vmem [shape: f32[1,128], index: 10, kind: input, shape index: {}]
  %s11 = inlined_call_operand.hbm [shape: bf16[384,128], index: 11, kind: input, shape index: {}]
  %s12 = inlined_call_operand.vmem [shape: f32[1,128], index: 12, kind: input, shape index: {}]
  %s13 = inlined_call_operand.vmem [shape: f32[1,128], index: 13, kind: input, shape index: {}]
  %s14 = inlined_call_operand.vmem [shape: f32[1,128], index: 14, kind: input, shape index: {}]
  %s15 = inlined_call_operand.hbm [shape: bf16[384,128], index: 15, kind: input, shape index: {}]
  %s16 = inlined_call_operand.vmem [shape: f32[1,128], index: 16, kind: input, shape index: {}]
  %s17 = inlined_call_operand.vmem [shape: f32[1,128], index: 17, kind: input, shape index: {}]
  %s18 = inlined_call_operand.vmem [shape: f32[1,128], index: 18, kind: input, shape index: {}]
  %s19 = inlined_call_operand.vmem [shape: f32[1,128], index: 19, kind: input, shape index: {}]
  %s20 = inlined_call_operand.vmem [shape: f32[1,128], index: 20, kind: input, shape index: {}]
  %s21 = inlined_call_operand.hbm [shape: f32[2,16,128], index: 21, kind: output, shape index: {}]
  %s22 = sld [smem:[#allocation0]]
  $region137: #{tpu_custom_call.1} parent=0
    _
  %s24 = ssub.s32 1, %s22
  %s25 = scalar_select 0, %s24, %s22
  $region1: #{tpu_custom_call.1} parent=0
    #allocation3 [shape = 'u8[16384]{0}', space=vmem, size = 0x4000, scoped, tag = 'input window, operand 0']
    #allocation4 [shape = 's32[2]{0}', space=sflag, size = 0x8, scoped, tag = 'scoped memory for tpu_custom_call.1']
    #allocation5 [shape = 's32[2]{0}', space=sflag, size = 0x8, scoped, tag = 'scoped memory for tpu_custom_call.1']
    #allocation6 [shape = 'u8[98304]{0}', space=vmem, size = 0x18000, scoped, tag = 'input window, operand 1, single buffered']
    #allocation7 [shape = 's32[1]{0}', space=sflag, size = 0x4, scoped, tag = 'scoped memory for tpu_custom_call.1']
    #allocation8 [shape = 'u8[98304]{0}', space=vmem, size = 0x18000, scoped, tag = 'input window, operand 5, single buffered']
    #allocation9 [shape = 'u8[98304]{0}', space=vmem, size = 0x18000, scoped, tag = 'input window, operand 11, single buffered']
    #allocation10 [shape = 's32[1]{0}', space=sflag, size = 0x4, scoped, tag = 'scoped memory for tpu_custom_call.1']
    #allocation11 [shape = 'u8[98304]{0}', space=vmem, size = 0x18000, scoped, tag = 'input window, operand 15, single buffered']
    #allocation12 [shape = 'u8[16384]{0}', space=vmem, size = 0x4000, scoped, tag = 'output window, operand 0']
    %26 = vsyncpa [#allocation4], 0
    %s27 = scalar_lea.sflag [#allocation4], 1
    %28 = vsyncpa %s27, 0
    %29 = vsyncpa [#allocation7], 0
    %30 = vsyncpa [#allocation10], 0
    %31 = vsyncpa [#allocation5], 0
    %s32 = scalar_lea.sflag [#allocation5], 1
    %33 = vsyncpa %s32, 0
    loop: start=0, step=1, limit=4
    $region2: #{tpu_custom_call.1} parent=1 // loop_pre_header
      _
    $region3: #{tpu_custom_call.1} parent=1 // loop_header
      %s35 = sphi 0, %s39
      %p36 = scmp.ge.s32.totalorder %s35, 4
      %s45 = sphi 0, %s47
      %s48 = sphi 0, %s45
      %s49 = sphi 0, %s48
      %s65 = sphi 0, %s49
      %s69 = sphi 0, %s69
      %s71 = sphi 0, %s69
      %s72 = sphi 0, %s71
      %s86 = sphi 0, %s72
      %s90 = sphi 0, %s90
      %s92 = sphi 0, %s90
      %s93 = sphi 0, %s92
      %s107 = sphi 0, %s93
      %s111 = sphi 0, %s111
      %s113 = sphi 0, %s111
      %s114 = sphi 0, %s113
      %s128 = sphi 0, %s114
      %s132 = sphi 0, %s132
      %s134 = sphi 0, %s132
      %s135 = sphi 0, %s134
      %s149 = sphi 0, %s135
      %s153 = sphi 0, %s153
      %s155 = sphi 0, %s153
      %s156 = sphi 0, %s155
      %s170 = sphi 0, %s156
      %s174 = sphi 0, %s174
      %s176 = sphi 0, %s174
      %s177 = sphi 0, %s176
      %s191 = sphi 0, %s177
      %s195 = sphi 0, %s195
      %s197 = sphi 0, %s195
      %s198 = sphi 0, %s197
      %s212 = sphi 0, %s198
      %s216 = sphi 0, %s216
      %s218 = sphi 0, %s216
      %s219 = sphi 0, %s218
      %s233 = sphi 0, %s219
      %s237 = sphi 0, %s237
      %s239 = sphi 0, %s237
      %s240 = sphi 0, %s239
      %s254 = sphi 0, %s240
      %s258 = sphi 0, %s258
      %s260 = sphi 0, %s258
      %s261 = sphi 0, %s260
      %s275 = sphi 0, %s261
      %s279 = sphi 0, %s279
      %s281 = sphi 0, %s279
      %s282 = sphi 0, %s281
      %s296 = sphi 0, %s282
      %s300 = sphi 0, %s300
      %s302 = sphi 0, %s300
      %s303 = sphi 0, %s302
      %s317 = sphi 0, %s303
      %s321 = sphi 0, %s321
      %s323 = sphi 0, %s321
      %s324 = sphi 0, %s323
      %s338 = sphi 0, %s324
      %s342 = sphi 0, %s342
      %s344 = sphi 0, %s342
      %s345 = sphi 0, %s344
      %s359 = sphi 0, %s345
      %s363 = sphi 0, %s363
      %s365 = sphi 0, %s363
      %s366 = sphi 0, %s365
      %s380 = sphi 0, %s366
      %s384 = sphi 0, %s384
      %s386 = sphi 0, %s384
      %s387 = sphi 0, %s386
      %s401 = sphi 0, %s387
      %s405 = sphi 0, %s405
      %s407 = sphi 0, %s405
      %s408 = sphi 0, %s407
      %s422 = sphi 0, %s408
      %s426 = sphi 0, %s426
      %s428 = sphi 0, %s426
      %s429 = sphi 0, %s428
      %s443 = sphi 0, %s429
      %s447 = sphi 0, %s447
      %s449 = sphi 0, %s447
      %s450 = sphi 0, %s449
      %s464 = sphi 0, %s450
      %s468 = sphi 0, %s468
      %s470 = sphi 0, %s468
      %s471 = sphi 0, %s470
      %s485 = sphi 0, %s471
      %s491 = sphi 0, %s493
      %s494 = sphi 0, %s491
      %s495 = sphi 0, %s494
      %s511 = sphi 0, %s495
    $region4: #{tpu_custom_call.1} parent=1 // loop_header_branch
      %38 = sbr.rel (%p36) target = $region8
    $region5: #{tpu_custom_call.1} parent=1 // loop_body
      %s40 = ssub.s32 %s35, 1
      %s41 = ssub.s32 %s35, 2
      %s42 = sadd.s32 %s35, 1
      %s43 = ssub.s32 %s35, %s42
      %p44 = scmp.eq.s32.totalorder %s43, 0
      %s46 = sadd.s32 %s45, 1
      %s47 = scalar_select %p44, %s45, %s46
      %p50 = pneg %p44
      %p51 = scmp.eq.s32.totalorder %s35, 1
      %p52 = por %p50, %p51
      %p53 = scmp.ne.s32.totalorder %s45, %s48
      %p54 = scmp.eq.s32.totalorder %s35, 0
      %p55 = por %p53, %p54
      %p56 = scmp.ne.s32.totalorder %s45, %s48
      %p57 = scmp.eq.s32.totalorder %s40, 1
      %p58 = por %p56, %p57
      %p59 = scmp.ne.s32.totalorder %s48, %s49
      %p60 = scmp.eq.s32.totalorder %s40, 0
      %p61 = por %p59, %p60
      %p62 = scmp.ne.s32.totalorder %s48, %s49
      %p63 = scmp.eq.s32.totalorder %s41, 1
      %p64 = por %p62, %p63
      %p66 = scmp.ne.s32.totalorder %s49, %s65
      %p67 = scmp.eq.s32.totalorder %s41, 0
      %p68 = por %p66, %p67
      %s70 = sadd.s32 %s69, 1
      %p73 = scmp.eq.s32.totalorder %s35, 1
      %p74 = scmp.ne.s32.totalorder %s69, %s71
      %p75 = scmp.eq.s32.totalorder %s35, 0
      %p76 = por %p74, %p75
      %p77 = scmp.ne.s32.totalorder %s69, %s71
      %p78 = scmp.eq.s32.totalorder %s40, 1
      %p79 = por %p77, %p78
      %p80 = scmp.ne.s32.totalorder %s71, %s72
      %p81 = scmp.eq.s32.totalorder %s40, 0
      %p82 = por %p80, %p81
      %p83 = scmp.ne.s32.totalorder %s71, %s72
      %p84 = scmp.eq.s32.totalorder %s41, 1
      %p85 = por %p83, %p84
      %p87 = scmp.ne.s32.totalorder %s72, %s86
      %p88 = scmp.eq.s32.totalorder %s41, 0
      %p89 = por %p87, %p88
      %s91 = sadd.s32 %s90, 1
      %p94 = scmp.eq.s32.totalorder %s35, 1
      %p95 = scmp.ne.s32.totalorder %s90, %s92
      %p96 = scmp.eq.s32.totalorder %s35, 0
      %p97 = por %p95, %p96
      %p98 = scmp.ne.s32.totalorder %s90, %s92
      %p99 = scmp.eq.s32.totalorder %s40, 1
      %p100 = por %p98, %p99
      %p101 = scmp.ne.s32.totalorder %s92, %s93
      %p102 = scmp.eq.s32.totalorder %s40, 0
      %p103 = por %p101, %p102
      %p104 = scmp.ne.s32.totalorder %s92, %s93
      %p105 = scmp.eq.s32.totalorder %s41, 1
      %p106 = por %p104, %p105
      %p108 = scmp.ne.s32.totalorder %s93, %s107
      %p109 = scmp.eq.s32.totalorder %s41, 0
      %p110 = por %p108, %p109
      %s112 = sadd.s32 %s111, 1
      %p115 = scmp.eq.s32.totalorder %s35, 1
      %p116 = scmp.ne.s32.totalorder %s111, %s113
      %p117 = scmp.eq.s32.totalorder %s35, 0
      %p118 = por %p116, %p117
      %p119 = scmp.ne.s32.totalorder %s111, %s113
      %p120 = scmp.eq.s32.totalorder %s40, 1
      %p121 = por %p119, %p120
      %p122 = scmp.ne.s32.totalorder %s113, %s114
      %p123 = scmp.eq.s32.totalorder %s40, 0
      %p124 = por %p122, %p123
      %p125 = scmp.ne.s32.totalorder %s113, %s114
      %p126 = scmp.eq.s32.totalorder %s41, 1
      %p127 = por %p125, %p126
      %p129 = scmp.ne.s32.totalorder %s114, %s128
      %p130 = scmp.eq.s32.totalorder %s41, 0
      %p131 = por %p129, %p130
      %s133 = sadd.s32 %s132, 1
      %p136 = scmp.eq.s32.totalorder %s35, 1
      %p137 = scmp.ne.s32.totalorder %s132, %s134
      %p138 = scmp.eq.s32.totalorder %s35, 0
      %p139 = por %p137, %p138
      %p140 = scmp.ne.s32.totalorder %s132, %s134
      %p141 = scmp.eq.s32.totalorder %s40, 1
      %p142 = por %p140, %p141
      %p143 = scmp.ne.s32.totalorder %s134, %s135
      %p144 = scmp.eq.s32.totalorder %s40, 0
      %p145 = por %p143, %p144
      %p146 = scmp.ne.s32.totalorder %s134, %s135
      %p147 = scmp.eq.s32.totalorder %s41, 1
      %p148 = por %p146, %p147
      %p150 = scmp.ne.s32.totalorder %s135, %s149
      %p151 = scmp.eq.s32.totalorder %s41, 0
      %p152 = por %p150, %p151
      %s154 = sadd.s32 %s153, 1
      %p157 = scmp.eq.s32.totalorder %s35, 1
      %p158 = scmp.ne.s32.totalorder %s153, %s155
      %p159 = scmp.eq.s32.totalorder %s35, 0
      %p160 = por %p158, %p159
      %p161 = scmp.ne.s32.totalorder %s153, %s155
      %p162 = scmp.eq.s32.totalorder %s40, 1
      %p163 = por %p161, %p162
      %p164 = scmp.ne.s32.totalorder %s155, %s156
      %p165 = scmp.eq.s32.totalorder %s40, 0
      %p166 = por %p164, %p165
      %p167 = scmp.ne.s32.totalorder %s155, %s156
      %p168 = scmp.eq.s32.totalorder %s41, 1
      %p169 = por %p167, %p168
      %p171 = scmp.ne.s32.totalorder %s156, %s170
      %p172 = scmp.eq.s32.totalorder %s41, 0
      %p173 = por %p171, %p172
      %s175 = sadd.s32 %s174, 1
      %p178 = scmp.eq.s32.totalorder %s35, 1
      %p179 = scmp.ne.s32.totalorder %s174, %s176
      %p180 = scmp.eq.s32.totalorder %s35, 0
      %p181 = por %p179, %p180
      %p182 = scmp.ne.s32.totalorder %s174, %s176
      %p183 = scmp.eq.s32.totalorder %s40, 1
      %p184 = por %p182, %p183
      %p185 = scmp.ne.s32.totalorder %s176, %s177
      %p186 = scmp.eq.s32.totalorder %s40, 0
      %p187 = por %p185, %p186
      %p188 = scmp.ne.s32.totalorder %s176, %s177
      %p189 = scmp.eq.s32.totalorder %s41, 1
      %p190 = por %p188, %p189
      %p192 = scmp.ne.s32.totalorder %s177, %s191
      %p193 = scmp.eq.s32.totalorder %s41, 0
      %p194 = por %p192, %p193
      %s196 = sadd.s32 %s195, 1
      %p199 = scmp.eq.s32.totalorder %s35, 1
      %p200 = scmp.ne.s32.totalorder %s195, %s197
      %p201 = scmp.eq.s32.totalorder %s35, 0
      %p202 = por %p200, %p201
      %p203 = scmp.ne.s32.totalorder %s195, %s197
      %p204 = scmp.eq.s32.totalorder %s40, 1
      %p205 = por %p203, %p204
      %p206 = scmp.ne.s32.totalorder %s197, %s198
      %p207 = scmp.eq.s32.totalorder %s40, 0
      %p208 = por %p206, %p207
      %p209 = scmp.ne.s32.totalorder %s197, %s198
      %p210 = scmp.eq.s32.totalorder %s41, 1
      %p211 = por %p209, %p210
      %p213 = scmp.ne.s32.totalorder %s198, %s212
      %p214 = scmp.eq.s32.totalorder %s41, 0
      %p215 = por %p213, %p214
      %s217 = sadd.s32 %s216, 1
      %p220 = scmp.eq.s32.totalorder %s35, 1
      %p221 = scmp.ne.s32.totalorder %s216, %s218
      %p222 = scmp.eq.s32.totalorder %s35, 0
      %p223 = por %p221, %p222
      %p224 = scmp.ne.s32.totalorder %s216, %s218
      %p225 = scmp.eq.s32.totalorder %s40, 1
      %p226 = por %p224, %p225
      %p227 = scmp.ne.s32.totalorder %s218, %s219
      %p228 = scmp.eq.s32.totalorder %s40, 0
      %p229 = por %p227, %p228
      %p230 = scmp.ne.s32.totalorder %s218, %s219
      %p231 = scmp.eq.s32.totalorder %s41, 1
      %p232 = por %p230, %p231
      %p234 = scmp.ne.s32.totalorder %s219, %s233
      %p235 = scmp.eq.s32.totalorder %s41, 0
      %p236 = por %p234, %p235
      %s238 = sadd.s32 %s237, 1
      %p241 = scmp.eq.s32.totalorder %s35, 1
      %p242 = scmp.ne.s32.totalorder %s237, %s239
      %p243 = scmp.eq.s32.totalorder %s35, 0
      %p244 = por %p242, %p243
      %p245 = scmp.ne.s32.totalorder %s237, %s239
      %p246 = scmp.eq.s32.totalorder %s40, 1
      %p247 = por %p245, %p246
      %p248 = scmp.ne.s32.totalorder %s239, %s240
      %p249 = scmp.eq.s32.totalorder %s40, 0
      %p250 = por %p248, %p249
      %p251 = scmp.ne.s32.totalorder %s239, %s240
      %p252 = scmp.eq.s32.totalorder %s41, 1
      %p253 = por %p251, %p252
      %p255 = scmp.ne.s32.totalorder %s240, %s254
      %p256 = scmp.eq.s32.totalorder %s41, 0
      %p257 = por %p255, %p256
      %s259 = sadd.s32 %s258, 1
      %p262 = scmp.eq.s32.totalorder %s35, 1
      %p263 = scmp.ne.s32.totalorder %s258, %s260
      %p264 = scmp.eq.s32.totalorder %s35, 0
      %p265 = por %p263, %p264
      %p266 = scmp.ne.s32.totalorder %s258, %s260
      %p267 = scmp.eq.s32.totalorder %s40, 1
      %p268 = por %p266, %p267
      %p269 = scmp.ne.s32.totalorder %s260, %s261
      %p270 = scmp.eq.s32.totalorder %s40, 0
      %p271 = por %p269, %p270
      %p272 = scmp.ne.s32.totalorder %s260, %s261
      %p273 = scmp.eq.s32.totalorder %s41, 1
      %p274 = por %p272, %p273
      %p276 = scmp.ne.s32.totalorder %s261, %s275
      %p277 = scmp.eq.s32.totalorder %s41, 0
      %p278 = por %p276, %p277
      %s280 = sadd.s32 %s279, 1
      %p283 = scmp.eq.s32.totalorder %s35, 1
      %p284 = scmp.ne.s32.totalorder %s279, %s281
      %p285 = scmp.eq.s32.totalorder %s35, 0
      %p286 = por %p284, %p285
      %p287 = scmp.ne.s32.totalorder %s279, %s281
      %p288 = scmp.eq.s32.totalorder %s40, 1
      %p289 = por %p287, %p288
      %p290 = scmp.ne.s32.totalorder %s281, %s282
      %p291 = scmp.eq.s32.totalorder %s40, 0
      %p292 = por %p290, %p291
      %p293 = scmp.ne.s32.totalorder %s281, %s282
      %p294 = scmp.eq.s32.totalorder %s41, 1
      %p295 = por %p293, %p294
      %p297 = scmp.ne.s32.totalorder %s282, %s296
      %p298 = scmp.eq.s32.totalorder %s41, 0
      %p299 = por %p297, %p298
      %s301 = sadd.s32 %s300, 1
      %p304 = scmp.eq.s32.totalorder %s35, 1
      %p305 = scmp.ne.s32.totalorder %s300, %s302
      %p306 = scmp.eq.s32.totalorder %s35, 0
      %p307 = por %p305, %p306
      %p308 = scmp.ne.s32.totalorder %s300, %s302
      %p309 = scmp.eq.s32.totalorder %s40, 1
      %p310 = por %p308, %p309
      %p311 = scmp.ne.s32.totalorder %s302, %s303
      %p312 = scmp.eq.s32.totalorder %s40, 0
      %p313 = por %p311, %p312
      %p314 = scmp.ne.s32.totalorder %s302, %s303
      %p315 = scmp.eq.s32.totalorder %s41, 1
      %p316 = por %p314, %p315
      %p318 = scmp.ne.s32.totalorder %s303, %s317
      %p319 = scmp.eq.s32.totalorder %s41, 0
      %p320 = por %p318, %p319
      %s322 = sadd.s32 %s321, 1
      %p325 = scmp.eq.s32.totalorder %s35, 1
      %p326 = scmp.ne.s32.totalorder %s321, %s323
      %p327 = scmp.eq.s32.totalorder %s35, 0
      %p328 = por %p326, %p327
      %p329 = scmp.ne.s32.totalorder %s321, %s323
      %p330 = scmp.eq.s32.totalorder %s40, 1
      %p331 = por %p329, %p330
      %p332 = scmp.ne.s32.totalorder %s323, %s324
      %p333 = scmp.eq.s32.totalorder %s40, 0
      %p334 = por %p332, %p333
      %p335 = scmp.ne.s32.totalorder %s323, %s324
      %p336 = scmp.eq.s32.totalorder %s41, 1
      %p337 = por %p335, %p336
      %p339 = scmp.ne.s32.totalorder %s324, %s338
      %p340 = scmp.eq.s32.totalorder %s41, 0
      %p341 = por %p339, %p340
      %s343 = sadd.s32 %s342, 1
      %p346 = scmp.eq.s32.totalorder %s35, 1
      %p347 = scmp.ne.s32.totalorder %s342, %s344
      %p348 = scmp.eq.s32.totalorder %s35, 0
      %p349 = por %p347, %p348
      %p350 = scmp.ne.s32.totalorder %s342, %s344
      %p351 = scmp.eq.s32.totalorder %s40, 1
      %p352 = por %p350, %p351
      %p353 = scmp.ne.s32.totalorder %s344, %s345
      %p354 = scmp.eq.s32.totalorder %s40, 0
      %p355 = por %p353, %p354
      %p356 = scmp.ne.s32.totalorder %s344, %s345
      %p357 = scmp.eq.s32.totalorder %s41, 1
      %p358 = por %p356, %p357
      %p360 = scmp.ne.s32.totalorder %s345, %s359
      %p361 = scmp.eq.s32.totalorder %s41, 0
      %p362 = por %p360, %p361
      %s364 = sadd.s32 %s363, 1
      %p367 = scmp.eq.s32.totalorder %s35, 1
      %p368 = scmp.ne.s32.totalorder %s363, %s365
      %p369 = scmp.eq.s32.totalorder %s35, 0
      %p370 = por %p368, %p369
      %p371 = scmp.ne.s32.totalorder %s363, %s365
      %p372 = scmp.eq.s32.totalorder %s40, 1
      %p373 = por %p371, %p372
      %p374 = scmp.ne.s32.totalorder %s365, %s366
      %p375 = scmp.eq.s32.totalorder %s40, 0
      %p376 = por %p374, %p375
      %p377 = scmp.ne.s32.totalorder %s365, %s366
      %p378 = scmp.eq.s32.totalorder %s41, 1
      %p379 = por %p377, %p378
      %p381 = scmp.ne.s32.totalorder %s366, %s380
      %p382 = scmp.eq.s32.totalorder %s41, 0
      %p383 = por %p381, %p382
      %s385 = sadd.s32 %s384, 1
      %p388 = scmp.eq.s32.totalorder %s35, 1
      %p389 = scmp.ne.s32.totalorder %s384, %s386
      %p390 = scmp.eq.s32.totalorder %s35, 0
      %p391 = por %p389, %p390
      %p392 = scmp.ne.s32.totalorder %s384, %s386
      %p393 = scmp.eq.s32.totalorder %s40, 1
      %p394 = por %p392, %p393
      %p395 = scmp.ne.s32.totalorder %s386, %s387
      %p396 = scmp.eq.s32.totalorder %s40, 0
      %p397 = por %p395, %p396
      %p398 = scmp.ne.s32.totalorder %s386, %s387
      %p399 = scmp.eq.s32.totalorder %s41, 1
      %p400 = por %p398, %p399
      %p402 = scmp.ne.s32.totalorder %s387, %s401
      %p403 = scmp.eq.s32.totalorder %s41, 0
      %p404 = por %p402, %p403
      %s406 = sadd.s32 %s405, 1
      %p409 = scmp.eq.s32.totalorder %s35, 1
      %p410 = scmp.ne.s32.totalorder %s405, %s407
      %p411 = scmp.eq.s32.totalorder %s35, 0
      %p412 = por %p410, %p411
      %p413 = scmp.ne.s32.totalorder %s405, %s407
      %p414 = scmp.eq.s32.totalorder %s40, 1
      %p415 = por %p413, %p414
      %p416 = scmp.ne.s32.totalorder %s407, %s408
      %p417 = scmp.eq.s32.totalorder %s40, 0
      %p418 = por %p416, %p417
      %p419 = scmp.ne.s32.totalorder %s407, %s408
      %p420 = scmp.eq.s32.totalorder %s41, 1
      %p421 = por %p419, %p420
      %p423 = scmp.ne.s32.totalorder %s408, %s422
      %p424 = scmp.eq.s32.totalorder %s41, 0
      %p425 = por %p423, %p424
      %s427 = sadd.s32 %s426, 1
      %p430 = scmp.eq.s32.totalorder %s35, 1
      %p431 = scmp.ne.s32.totalorder %s426, %s428
      %p432 = scmp.eq.s32.totalorder %s35, 0
      %p433 = por %p431, %p432
      %p434 = scmp.ne.s32.totalorder %s426, %s428
      %p435 = scmp.eq.s32.totalorder %s40, 1
      %p436 = por %p434, %p435
      %p437 = scmp.ne.s32.totalorder %s428, %s429
      %p438 = scmp.eq.s32.totalorder %s40, 0
      %p439 = por %p437, %p438
      %p440 = scmp.ne.s32.totalorder %s428, %s429
      %p441 = scmp.eq.s32.totalorder %s41, 1
      %p442 = por %p440, %p441
      %p444 = scmp.ne.s32.totalorder %s429, %s443
      %p445 = scmp.eq.s32.totalorder %s41, 0
      %p446 = por %p444, %p445
      %s448 = sadd.s32 %s447, 1
      %p451 = scmp.eq.s32.totalorder %s35, 1
      %p452 = scmp.ne.s32.totalorder %s447, %s449
      %p453 = scmp.eq.s32.totalorder %s35, 0
      %p454 = por %p452, %p453
      %p455 = scmp.ne.s32.totalorder %s447, %s449
      %p456 = scmp.eq.s32.totalorder %s40, 1
      %p457 = por %p455, %p456
      %p458 = scmp.ne.s32.totalorder %s449, %s450
      %p459 = scmp.eq.s32.totalorder %s40, 0
      %p460 = por %p458, %p459
      %p461 = scmp.ne.s32.totalorder %s449, %s450
      %p462 = scmp.eq.s32.totalorder %s41, 1
      %p463 = por %p461, %p462
      %p465 = scmp.ne.s32.totalorder %s450, %s464
      %p466 = scmp.eq.s32.totalorder %s41, 0
      %p467 = por %p465, %p466
      %s469 = sadd.s32 %s468, 1
      %p472 = scmp.eq.s32.totalorder %s35, 1
      %p473 = scmp.ne.s32.totalorder %s468, %s470
      %p474 = scmp.eq.s32.totalorder %s35, 0
      %p475 = por %p473, %p474
      %p476 = scmp.ne.s32.totalorder %s468, %s470
      %p477 = scmp.eq.s32.totalorder %s40, 1
      %p478 = por %p476, %p477
      %p479 = scmp.ne.s32.totalorder %s470, %s471
      %p480 = scmp.eq.s32.totalorder %s40, 0
      %p481 = por %p479, %p480
      %p482 = scmp.ne.s32.totalorder %s470, %s471
      %p483 = scmp.eq.s32.totalorder %s41, 1
      %p484 = por %p482, %p483
      %p486 = scmp.ne.s32.totalorder %s471, %s485
      %p487 = scmp.eq.s32.totalorder %s41, 0
      %p488 = por %p486, %p487
      %s489 = ssub.s32 %s35, %s42
      %p490 = scmp.eq.s32.totalorder %s489, 0
      %s492 = sadd.s32 %s491, 1
      %s493 = scalar_select %p490, %s491, %s492
      %p496 = pneg %p490
      %p497 = scmp.eq.s32.totalorder %s35, 1
      %p498 = por %p496, %p497
      %p499 = scmp.ne.s32.totalorder %s491, %s494
      %p500 = scmp.eq.s32.totalorder %s35, 0
      %p501 = por %p499, %p500
      %p502 = scmp.ne.s32.totalorder %s491, %s494
      %p503 = scmp.eq.s32.totalorder %s40, 1
      %p504 = por %p502, %p503
      %p505 = scmp.ne.s32.totalorder %s494, %s495
      %p506 = scmp.eq.s32.totalorder %s40, 0
      %p507 = por %p505, %p506
      %p508 = scmp.ne.s32.totalorder %s494, %s495
      %p509 = scmp.eq.s32.totalorder %s41, 1
      %p510 = por %p508, %p509
      %p512 = scmp.ne.s32.totalorder %s495, %s511
      %p513 = scmp.eq.s32.totalorder %s41, 0
      %p514 = por %p512, %p513
      %p515 = scmp.le.s32.totalorder 1, %s35
      %p516 = scmp.lt.s32.totalorder %s35, 3
      %p517 = pnand %p515, %p516
      %p518 = pneg %p517
      // Predicated region
      $region9: #{tpu_custom_call.1} parent=5 // pred_check
        _
      $region10: #{tpu_custom_call.1} parent=5 // pred_check_branch
        %520 = sbr.rel (%p517) target = $region12
      $region11: #{tpu_custom_call.1} parent=5 // pred_region
        %s521 = ssub.s32 %s35, 1
        // Predicated region
        $region13: #{tpu_custom_call.1} parent=11 // pred_check
          %p522 = pneg %p82
        $region14: #{tpu_custom_call.1} parent=11 // pred_check_branch
          %524 = sbr.rel (%p522) target = $region16
        $region15: #{tpu_custom_call.1} parent=11 // pred_region
          %s526 = ssub.s32 3072, 3072
          %527 = vsyncadd [#allocation7], %s526
          %s528 = sshll.u32 [#allocation6], 4
          %s529 = int_to_ptr.vmem [resolvable:$true] %s528
          %534 = dma.hbm_to_vmem [thread:$0]  %s1, 3072, %s529, [#allocation7], 64, 64, 4
        $region16: #{tpu_custom_call.1} parent=11 // pred_fallthru
          _
        // Predicated region
        $region17: #{tpu_custom_call.1} parent=11 // pred_check
          %p535 = pneg %p103
        $region18: #{tpu_custom_call.1} parent=11 // pred_check_branch
          %537 = sbr.rel (%p535) target = $region20
        $region19: #{tpu_custom_call.1} parent=11 // pred_region
          _
        $region20: #{tpu_custom_call.1} parent=11 // pred_fallthru
          _
        // Predicated region
        $region21: #{tpu_custom_call.1} parent=11 // pred_check
          %p538 = pneg %p124
        $region22: #{tpu_custom_call.1} parent=11 // pred_check_branch
          %540 = sbr.rel (%p538) target = $region24
        $region23: #{tpu_custom_call.1} parent=11 // pred_region
          _
        $region24: #{tpu_custom_call.1} parent=11 // pred_fallthru
          _
        // Predicated region
        $region25: #{tpu_custom_call.1} parent=11 // pred_check
          %p541 = pneg %p145
        $region26: #{tpu_custom_call.1} parent=11 // pred_check_branch
          %543 = sbr.rel (%p541) target = $region28
        $region27: #{tpu_custom_call.1} parent=11 // pred_region
          _
        $region28: #{tpu_custom_call.1} parent=11 // pred_fallthru
          _
        // Predicated region
        $region29: #{tpu_custom_call.1} parent=11 // pred_check
          %p544 = pneg %p166
        $region30: #{tpu_custom_call.1} parent=11 // pred_check_branch
          %546 = sbr.rel (%p544) target = $region32
        $region31: #{tpu_custom_call.1} parent=11 // pred_region
          %s548 = ssub.s32 3072, 3072
          %549 = vsyncadd [#allocation7], %s548
          %s550 = sshll.u32 [#allocation8], 4
          %s551 = int_to_ptr.vmem [resolvable:$true] %s550
          %556 = dma.hbm_to_vmem [thread:$0]  %s5, 3072, %s551, [#allocation7], 64, 64, 4
        $region32: #{tpu_custom_call.1} parent=11 // pred_fallthru
          _
        // Predicated region
        $region33: #{tpu_custom_call.1} parent=11 // pred_check
          %p557 = pneg %p187
        $region34: #{tpu_custom_call.1} parent=11 // pred_check_branch
          %559 = sbr.rel (%p557) target = $region36
        $region35: #{tpu_custom_call.1} parent=11 // pred_region
          _
        $region36: #{tpu_custom_call.1} parent=11 // pred_fallthru
          _
        // Predicated region
        $region37: #{tpu_custom_call.1} parent=11 // pred_check
          %p560 = pneg %p208
        $region38: #{tpu_custom_call.1} parent=11 // pred_check_branch
          %562 = sbr.rel (%p560) target = $region40
        $region39: #{tpu_custom_call.1} parent=11 // pred_region
          _
        $region40: #{tpu_custom_call.1} parent=11 // pred_fallthru
          _
        // Predicated region
        $region41: #{tpu_custom_call.1} parent=11 // pred_check
          %p563 = pneg %p229
        $region42: #{tpu_custom_call.1} parent=11 // pred_check_branch
          %565 = sbr.rel (%p563) target = $region44
        $region43: #{tpu_custom_call.1} parent=11 // pred_region
          _
        $region44: #{tpu_custom_call.1} parent=11 // pred_fallthru
          _
        // Predicated region
        $region45: #{tpu_custom_call.1} parent=11 // pred_check
          %p566 = pneg %p250
        $region46: #{tpu_custom_call.1} parent=11 // pred_check_branch
          %568 = sbr.rel (%p566) target = $region48
        $region47: #{tpu_custom_call.1} parent=11 // pred_region
          _
        $region48: #{tpu_custom_call.1} parent=11 // pred_fallthru
          _
        // Predicated region
        $region49: #{tpu_custom_call.1} parent=11 // pred_check
          %p569 = pneg %p271
        $region50: #{tpu_custom_call.1} parent=11 // pred_check_branch
          %571 = sbr.rel (%p569) target = $region52
        $region51: #{tpu_custom_call.1} parent=11 // pred_region
          _
        $region52: #{tpu_custom_call.1} parent=11 // pred_fallthru
          _
        // Predicated region
        $region53: #{tpu_custom_call.1} parent=11 // pred_check
          %p572 = pneg %p292
        $region54: #{tpu_custom_call.1} parent=11 // pred_check_branch
          %574 = sbr.rel (%p572) target = $region56
        $region55: #{tpu_custom_call.1} parent=11 // pred_region
          %s576 = ssub.s32 3072, 3072
          %577 = vsyncadd [#allocation10], %s576
          %s578 = sshll.u32 [#allocation9], 4
          %s579 = int_to_ptr.vmem [resolvable:$true] %s578
          %584 = dma.hbm_to_vmem [thread:$0]  %s11, 3072, %s579, [#allocation10], 64, 64, 4
        $region56: #{tpu_custom_call.1} parent=11 // pred_fallthru
          _
        // Predicated region
        $region57: #{tpu_custom_call.1} parent=11 // pred_check
          %p585 = pneg %p313
        $region58: #{tpu_custom_call.1} parent=11 // pred_check_branch
          %587 = sbr.rel (%p585) target = $region60
        $region59: #{tpu_custom_call.1} parent=11 // pred_region
          _
        $region60: #{tpu_custom_call.1} parent=11 // pred_fallthru
          _
        // Predicated region
        $region61: #{tpu_custom_call.1} parent=11 // pred_check
          %p588 = pneg %p334
        $region62: #{tpu_custom_call.1} parent=11 // pred_check_branch
          %590 = sbr.rel (%p588) target = $region64
        $region63: #{tpu_custom_call.1} parent=11 // pred_region
          _
        $region64: #{tpu_custom_call.1} parent=11 // pred_fallthru
          _
        // Predicated region
        $region65: #{tpu_custom_call.1} parent=11 // pred_check
          %p591 = pneg %p355
        $region66: #{tpu_custom_call.1} parent=11 // pred_check_branch
          %593 = sbr.rel (%p591) target = $region68
        $region67: #{tpu_custom_call.1} parent=11 // pred_region
          _
        $region68: #{tpu_custom_call.1} parent=11 // pred_fallthru
          _
        // Predicated region
        $region69: #{tpu_custom_call.1} parent=11 // pred_check
          %p594 = pneg %p376
        $region70: #{tpu_custom_call.1} parent=11 // pred_check_branch
          %596 = sbr.rel (%p594) target = $region72
        $region71: #{tpu_custom_call.1} parent=11 // pred_region
          %s598 = ssub.s32 3072, 3072
          %599 = vsyncadd [#allocation10], %s598
          %s600 = sshll.u32 [#allocation11], 4
          %s601 = int_to_ptr.vmem [resolvable:$true] %s600
          %606 = dma.hbm_to_vmem [thread:$0]  %s15, 3072, %s601, [#allocation10], 64, 64, 4
        $region72: #{tpu_custom_call.1} parent=11 // pred_fallthru
          _
        // Predicated region
        $region73: #{tpu_custom_call.1} parent=11 // pred_check
          %p607 = pneg %p397
        $region74: #{tpu_custom_call.1} parent=11 // pred_check_branch
          %609 = sbr.rel (%p607) target = $region76
        $region75: #{tpu_custom_call.1} parent=11 // pred_region
          _
        $region76: #{tpu_custom_call.1} parent=11 // pred_fallthru
          _
        // Predicated region
        $region77: #{tpu_custom_call.1} parent=11 // pred_check
          %p610 = pneg %p418
        $region78: #{tpu_custom_call.1} parent=11 // pred_check_branch
          %612 = sbr.rel (%p610) target = $region80
        $region79: #{tpu_custom_call.1} parent=11 // pred_region
          _
        $region80: #{tpu_custom_call.1} parent=11 // pred_fallthru
          _
        // Predicated region
        $region81: #{tpu_custom_call.1} parent=11 // pred_check
          %p613 = pneg %p439
        $region82: #{tpu_custom_call.1} parent=11 // pred_check_branch
          %615 = sbr.rel (%p613) target = $region84
        $region83: #{tpu_custom_call.1} parent=11 // pred_region
          _
        $region84: #{tpu_custom_call.1} parent=11 // pred_fallthru
          _
        // Predicated region
        $region85: #{tpu_custom_call.1} parent=11 // pred_check
          %p616 = pneg %p460
        $region86: #{tpu_custom_call.1} parent=11 // pred_check_branch
          %618 = sbr.rel (%p616) target = $region88
        $region87: #{tpu_custom_call.1} parent=11 // pred_region
          _
        $region88: #{tpu_custom_call.1} parent=11 // pred_fallthru
          _
        // Predicated region
        $region89: #{tpu_custom_call.1} parent=11 // pred_check
          %p619 = pneg %p481
        $region90: #{tpu_custom_call.1} parent=11 // pred_check_branch
          %621 = sbr.rel (%p619) target = $region92
        $region91: #{tpu_custom_call.1} parent=11 // pred_region
          _
        $region92: #{tpu_custom_call.1} parent=11 // pred_fallthru
          _
      $region12: #{tpu_custom_call.1} parent=5 // pred_fallthru
        _
      %p622 = scmp.lt.s32.totalorder %s35, 2
      // Predicated region
      $region93: #{tpu_custom_call.1} parent=5 // pred_check
        %p623 = pneg %p622
      $region94: #{tpu_custom_call.1} parent=5 // pred_check_branch
        %625 = sbr.rel (%p623) target = $region96
      $region95: #{tpu_custom_call.1} parent=5 // pred_region
        // Predicated region
        $region97: #{tpu_custom_call.1} parent=95 // pred_check
          %p626 = pneg %p55
        $region98: #{tpu_custom_call.1} parent=95 // pred_check_branch
          %628 = sbr.rel (%p626) target = $region100
        $region99: #{tpu_custom_call.1} parent=95 // pred_region
          %s629 = sand.u32 %s45, 1
          %s630 = scalar_lea.sflag [#allocation4], %s629
          %s631 = sand.u32 %s45, 1
          %s632 = smul.addr %s631, 16
          %s633 = scalar_lea.vmem [#allocation3], %s632
          %s635 = ssub.s32 256, 256
          %636 = vsyncadd %s630, %s635
          %s637 = smul.addr %s35, 2
          %s638 = smul.addr %s637, 128
          %s639 = scalar_lea.hbm %s0, %s638
          %s640 = sshll.u32 %s633, 4
          %s641 = int_to_ptr.vmem [resolvable:$true] %s640
          %646 = dma.hbm_to_vmem [thread:$0]  %s639, 256, %s641, %s630, 128, 128, 8
        $region100: #{tpu_custom_call.1} parent=95 // pred_fallthru
          _
      $region96: #{tpu_custom_call.1} parent=5 // pred_fallthru
        _
      %p647 = scmp.le.s32.totalorder 1, %s35
      %p648 = scmp.lt.s32.totalorder %s35, 3
      %p649 = pnand %p647, %p648
      %p650 = pneg %p649
      // Predicated region
      $region101: #{tpu_custom_call.1} parent=5 // pred_check
        _
      $region102: #{tpu_custom_call.1} parent=5 // pred_check_branch
        %652 = sbr.rel (%p649) target = $region104
      $region103: #{tpu_custom_call.1} parent=5 // pred_region
        %s653 = ssub.s32 %s35, 1
        %s654 = sand.u32 %s48, 1
        %s655 = scalar_lea.sflag [#allocation4], %s654
        %s656 = sand.u32 %s48, 1
        %s657 = smul.addr %s656, 16
        %s658 = scalar_lea.vmem [#allocation3], %s657
        // Predicated region
        $region105: #{tpu_custom_call.1} parent=103 // pred_check
          %p659 = pneg %p61
        $region106: #{tpu_custom_call.1} parent=103 // pred_check_branch
          %661 = sbr.rel (%p659) target = $region108
        $region107: #{tpu_custom_call.1} parent=103 // pred_region
          %662 = dma.done %s655, 256
        $region108: #{tpu_custom_call.1} parent=103 // pred_fallthru
          _
        // Predicated region
        $region109: #{tpu_custom_call.1} parent=103 // pred_check
          %p663 = pneg %p82
        $region110: #{tpu_custom_call.1} parent=103 // pred_check_branch
          %665 = sbr.rel (%p663) target = $region112
        $region111: #{tpu_custom_call.1} parent=103 // pred_region
          %666 = dma.done [#allocation7], 3072
        $region112: #{tpu_custom_call.1} parent=103 // pred_fallthru
          _
        // Predicated region
        $region113: #{tpu_custom_call.1} parent=103 // pred_check
          %p667 = pneg %p166
        $region114: #{tpu_custom_call.1} parent=103 // pred_check_branch
          %669 = sbr.rel (%p667) target = $region116
        $region115: #{tpu_custom_call.1} parent=103 // pred_region
          %670 = dma.done [#allocation7], 3072
        $region116: #{tpu_custom_call.1} parent=103 // pred_fallthru
          _
        // Predicated region
        $region117: #{tpu_custom_call.1} parent=103 // pred_check
          %p671 = pneg %p292
        $region118: #{tpu_custom_call.1} parent=103 // pred_check_branch
          %673 = sbr.rel (%p671) target = $region120
        $region119: #{tpu_custom_call.1} parent=103 // pred_region
          %674 = dma.done [#allocation10], 3072
        $region120: #{tpu_custom_call.1} parent=103 // pred_fallthru
          _
        // Predicated region
        $region121: #{tpu_custom_call.1} parent=103 // pred_check
          %p675 = pneg %p376
        $region122: #{tpu_custom_call.1} parent=103 // pred_check_branch
          %677 = sbr.rel (%p675) target = $region124
        $region123: #{tpu_custom_call.1} parent=103 // pred_region
          %678 = dma.done [#allocation10], 3072
        $region124: #{tpu_custom_call.1} parent=103 // pred_fallthru
          _
        %s679 = sand.u32 %s48, 1
        %s680 = scalar_lea.sflag [#allocation4], %s679
        %s681 = sand.u32 %s48, 1
        %s682 = smul.addr %s681, 16
        %s683 = scalar_lea.vmem [#allocation3], %s682
        %p684 = pneg %p61
        %p685 = pneg %p58
        %p686 = pneg %p82
        %p687 = pneg %p79
        %p688 = pneg %p103
        %p689 = pneg %p100
        %p690 = pneg %p124
        %p691 = pneg %p121
        %p692 = pneg %p145
        %p693 = pneg %p142
        %p694 = pneg %p166
        %p695 = pneg %p163
        %p696 = pneg %p187
        %p697 = pneg %p184
        %p698 = pneg %p208
        %p699 = pneg %p205
        %p700 = pneg %p229
        %p701 = pneg %p226
        %p702 = pneg %p250
        %p703 = pneg %p247
        %p704 = pneg %p271
        %p705 = pneg %p268
        %p706 = pneg %p292
        %p707 = pneg %p289
        %p708 = pneg %p313
        %p709 = pneg %p310
        %p710 = pneg %p334
        %p711 = pneg %p331
        %p712 = pneg %p355
        %p713 = pneg %p352
        %p714 = pneg %p376
        %p715 = pneg %p373
        %p716 = pneg %p397
        %p717 = pneg %p394
        %p718 = pneg %p418
        %p719 = pneg %p415
        %p720 = pneg %p439
        %p721 = pneg %p436
        %p722 = pneg %p460
        %p723 = pneg %p457
        %p724 = pneg %p481
        %p725 = pneg %p478
        %p726 = pneg %p507
        %p727 = pneg %p504
        %s728 = sand.u32 %s494, 1
        %s729 = scalar_lea.sflag [#allocation5], %s728
        %s730 = sand.u32 %s494, 1
        %s731 = smul.addr %s730, 16
        %s732 = scalar_lea.vmem [#allocation12], %s731
        %v734 = vlaneseq
        %v735 = vand.u32 %v734, 127
        %vm736 = vcmp.lt.s32.totalorder %v735, 32
        %v737 = vsel %vm736, 1, 0
        %v738 = vcvt.s32.f32 %v737
        %v739 = vld [vmem:[%s658] sm:$0xff]
        %v740 = vld [vmem:[%s658 + $0x8] sm:$0xff]
        %v741 = vpack.c.bf16 %v740, %v739
        %742 = vst [vmem:[#allocation2] sm:$0x1] 0
        %743 = vst [vmem:[#allocation2 + $0x8] sm:$0x1] 0
        %744 = vst [vmem:[#allocation2 + $0x10] sm:$0x1] 0
        %v746 = vrot.slane %v741, 7
        %748 = vst [vmem:[#allocation2] sm:$0xfe] %v746
        %v750 = vshrl.u32 %v741, 16
        %v752 = vrot.slane %v750, 7
        %v753 = vshll.u32 %v741, 16
        %v755 = vor.u32 %v752, %v753
        %vm757 = vcmask 1047552
        %vm758 = vsmask.f32 7938
        %vm759 = vmand %vm757, %vm758
        %v760 = vld [vmem:[#allocation2 + $0x8] sm:$0xff]
        %v761 = vsel %vm759, %v755, %v760
        %762 = vst [vmem:[#allocation2 + $0x8] sm:$0xff] %v761
        %763 = vst [vmem:[#allocation2 + $0x10] sm:$0xff] %v741
        %v764 = vld [vmem:[#allocation2] sm:$0xff]
        %v765 = vld [vmem:[#allocation2 + $0x8] sm:$0xff]
        %v766 = vld [vmem:[#allocation2 + $0x10] sm:$0xff]
        %v767 = vld [vmem:[#allocation6] sm:$0xf]
        %v768 = vld [vmem:[#allocation6 + $0x4] sm:$0xf]
        %v769 = vld [vmem:[#allocation6 + $0x8] sm:$0xf]
        %v770 = vld [vmem:[#allocation6 + $0xc] sm:$0xf]
        %v771 = vld [vmem:[#allocation6 + $0x10] sm:$0xf]
        %v772 = vld [vmem:[#allocation6 + $0x14] sm:$0xf]
        %v773 = vld [vmem:[#allocation6 + $0x18] sm:$0xf]
        %v774 = vld [vmem:[#allocation6 + $0x1c] sm:$0xf]
        %v775 = vld [vmem:[#allocation6 + $0x20] sm:$0xf]
        %v776 = vld [vmem:[#allocation6 + $0x24] sm:$0xf]
        %v777 = vld [vmem:[#allocation6 + $0x28] sm:$0xf]
        %v778 = vld [vmem:[#allocation6 + $0x2c] sm:$0xf]
        %v779 = vld [vmem:[#allocation6 + $0x30] sm:$0xf]
        %v780 = vld [vmem:[#allocation6 + $0x34] sm:$0xf]
        %v781 = vld [vmem:[#allocation6 + $0x38] sm:$0xf]
        %v782 = vld [vmem:[#allocation6 + $0x3c] sm:$0xf]
        %v783 = vld [vmem:[#allocation6 + $0x40] sm:$0xf]
        %v784 = vld [vmem:[#allocation6 + $0x44] sm:$0xf]
        %v785 = vld [vmem:[#allocation6 + $0x48] sm:$0xf]
        %v786 = vld [vmem:[#allocation6 + $0x4c] sm:$0xf]
        %v787 = vld [vmem:[#allocation6 + $0x50] sm:$0xf]
        %v788 = vld [vmem:[#allocation6 + $0x54] sm:$0xf]
        %v789 = vld [vmem:[#allocation6 + $0x58] sm:$0xf]
        %v790 = vld [vmem:[#allocation6 + $0x5c] sm:$0xf]
        %v791 = vld [vmem:[#allocation6 + $0x60] sm:$0xf]
        %v792 = vld [vmem:[#allocation6 + $0x64] sm:$0xf]
        %v793 = vld [vmem:[#allocation6 + $0x68] sm:$0xf]
        %v794 = vld [vmem:[#allocation6 + $0x6c] sm:$0xf]
        %v795 = vld [vmem:[#allocation6 + $0x70] sm:$0xf]
        %v796 = vld [vmem:[#allocation6 + $0x74] sm:$0xf]
        %v797 = vld [vmem:[#allocation6 + $0x78] sm:$0xf]
        %v798 = vld [vmem:[#allocation6 + $0x7c] sm:$0xf]
        %v799 = vld [vmem:[#allocation6 + $0x80] sm:$0xf]
        %v800 = vld [vmem:[#allocation6 + $0x84] sm:$0xf]
        %v801 = vld [vmem:[#allocation6 + $0x88] sm:$0xf]
        %v802 = vld [vmem:[#allocation6 + $0x8c] sm:$0xf]
        %v803 = vld [vmem:[#allocation6 + $0x90] sm:$0xf]
        %v804 = vld [vmem:[#allocation6 + $0x94] sm:$0xf]
        %v805 = vld [vmem:[#allocation6 + $0x98] sm:$0xf]
        %v806 = vld [vmem:[#allocation6 + $0x9c] sm:$0xf]
        %v807 = vld [vmem:[#allocation6 + $0xa0] sm:$0xf]
        %v808 = vld [vmem:[#allocation6 + $0xa4] sm:$0xf]
        %v809 = vld [vmem:[#allocation6 + $0xa8] sm:$0xf]
        %v810 = vld [vmem:[#allocation6 + $0xac] sm:$0xf]
        %v811 = vld [vmem:[#allocation6 + $0xb0] sm:$0xf]
        %v812 = vld [vmem:[#allocation6 + $0xb4] sm:$0xf]
        %v813 = vld [vmem:[#allocation6 + $0xb8] sm:$0xf]
        %v814 = vld [vmem:[#allocation6 + $0xbc] sm:$0xf]
        %v815 = vld [vmem:[%s2] sm:$0x1]
        %v817 = vlaneseq
        %v818 = vshrl.u32 %v817, 7
        %v819 = vsub.s32 0, %v818
        %v820 = vrot.slane %v815, %v819
        %v870 = vunpack.c.l.b16 %v767
        %v871 = vunpack.c.l.b16 %v768
        %v872 = vunpack.c.l.b16 %v769
        %v873 = vunpack.c.l.b16 %v770
        %v874 = vunpack.c.l.b16 %v771
        %v875 = vunpack.c.l.b16 %v772
        %v876 = vunpack.c.l.b16 %v773
        %v877 = vunpack.c.l.b16 %v774
        %v878 = vunpack.c.l.b16 %v775
        %v879 = vunpack.c.l.b16 %v776
        %v880 = vunpack.c.l.b16 %v777
        %v881 = vunpack.c.l.b16 %v778
        %v882 = vunpack.c.l.b16 %v779
        %v883 = vunpack.c.l.b16 %v780
        %v884 = vunpack.c.l.b16 %v781
        %v885 = vunpack.c.l.b16 %v782
        %v886 = vunpack.c.l.b16 %v783
        %v887 = vunpack.c.l.b16 %v784
        %v888 = vunpack.c.l.b16 %v785
        %v889 = vunpack.c.l.b16 %v786
        %v890 = vunpack.c.l.b16 %v787
        %v891 = vunpack.c.l.b16 %v788
        %v892 = vunpack.c.l.b16 %v789
        %v893 = vunpack.c.l.b16 %v790
        %v894 = vunpack.c.l.b16 %v791
        %v895 = vunpack.c.l.b16 %v792
        %v896 = vunpack.c.l.b16 %v793
        %v897 = vunpack.c.l.b16 %v794
        %v898 = vunpack.c.l.b16 %v795
        %v899 = vunpack.c.l.b16 %v796
        %v900 = vunpack.c.l.b16 %v797
        %v901 = vunpack.c.l.b16 %v798
        %v902 = vunpack.c.l.b16 %v799
        %v903 = vunpack.c.l.b16 %v800
        %v904 = vunpack.c.l.b16 %v801
        %v905 = vunpack.c.l.b16 %v802
        %v906 = vunpack.c.l.b16 %v803
        %v907 = vunpack.c.l.b16 %v804
        %v908 = vunpack.c.l.b16 %v805
        %v909 = vunpack.c.l.b16 %v806
        %v910 = vunpack.c.l.b16 %v807
        %v911 = vunpack.c.l.b16 %v808
        %v912 = vunpack.c.l.b16 %v809
        %v913 = vunpack.c.l.b16 %v810
        %v914 = vunpack.c.l.b16 %v811
        %v915 = vunpack.c.l.b16 %v812
        %v916 = vunpack.c.l.b16 %v813
        %v917 = vunpack.c.l.b16 %v814
        %v918 = vpack.c.b16 %v871, %v870
        %v919 = vpack.c.b16 %v873, %v872
        %v920 = vpack.c.b16 %v875, %v874
        %v921 = vpack.c.b16 %v877, %v876
        %v922 = vpack.c.b16 %v879, %v878
        %v923 = vpack.c.b16 %v881, %v880
        %v924 = vpack.c.b16 %v883, %v882
        %v925 = vpack.c.b16 %v885, %v884
        %v926 = vpack.c.b16 %v887, %v886
        %v927 = vpack.c.b16 %v889, %v888
        %v928 = vpack.c.b16 %v891, %v890
        %v929 = vpack.c.b16 %v893, %v892
        %v930 = vpack.c.b16 %v895, %v894
        %v931 = vpack.c.b16 %v897, %v896
        %v932 = vpack.c.b16 %v899, %v898
        %v933 = vpack.c.b16 %v901, %v900
        %v934 = vpack.c.b16 %v903, %v902
        %v935 = vpack.c.b16 %v905, %v904
        %v936 = vpack.c.b16 %v907, %v906
        %v937 = vpack.c.b16 %v909, %v908
        %v938 = vpack.c.b16 %v911, %v910
        %v939 = vpack.c.b16 %v913, %v912
        %v940 = vpack.c.b16 %v915, %v914
        %v941 = vpack.c.b16 %v917, %v916
        %966 = vmatprep.subr.bf16.mxu0 0
        %967 = vmatpush1.bf16.msra.mxu0 %v918
        %968 = vmatprep.subr.bf16.mxu0 0
        %969 = vmatpush1.bf16.msra.mxu0 %v919
        %970 = vmatprep.subr.bf16.mxu0 0
        %971 = vmatpush1.bf16.msra.mxu0 %v920
        %972 = vmatprep.subr.bf16.mxu0 0
        %973 = vmatpush1.bf16.msra.mxu0 %v921
        %974 = vmatprep.subr.bf16.mxu0 0
        %975 = vmatpush1.bf16.msra.mxu0 %v922
        %976 = vmatprep.subr.bf16.mxu0 0
        %977 = vmatpush1.bf16.msra.mxu0 %v923
        %978 = vmatprep.subr.bf16.mxu0 0
        %979 = vmatpush1.bf16.msra.mxu0 %v924
        %980 = vmatprep.subr.bf16.mxu0 0
        %981 = vmatpush1.bf16.msra.mxu0 %v925
        %982 = vmatprep.subr.bf16.mxu0 0
        %983 = vmatpush1.bf16.msra.mxu0 %v926
        %984 = vmatprep.subr.bf16.mxu0 0
        %985 = vmatpush1.bf16.msra.mxu0 %v927
        %986 = vmatprep.subr.bf16.mxu0 0
        %987 = vmatpush1.bf16.msra.mxu0 %v928
        %988 = vmatprep.subr.bf16.mxu0 0
        %989 = vmatpush1.bf16.msra.mxu0 %v929
        %990 = vmatprep.subr.bf16.mxu0 0
        %991 = vmatpush1.bf16.msra.mxu0 %v930
        %992 = vmatprep.subr.bf16.mxu0 0
        %993 = vmatpush1.bf16.msra.mxu0 %v931
        %994 = vmatprep.subr.bf16.mxu0 0
        %995 = vmatpush1.bf16.msra.mxu0 %v932
        %996 = vmatprep.subr.bf16.mxu0 0
        %997 = vmatpush1.bf16.msra.mxu0 %v933
        %998 = vmatprep.mubr.bf16.mxu0 %v765
        %999 = vmatmul.mubr.bf16.gmra.mrb[0].mxu0 %v764
        %v1000 = vpop.f32.mrb[0].mxu0
        %v1001 = vadd.f32 %v820, %v1000
        %v1002 = vpop.f32.mrb[0].mxu0
        %v1003 = vpop.f32.mrb[0].mxu0
        %v1004 = vadd.f32 %v820, %v1003
        %v1005 = vpop.f32.mrb[0].mxu0
        %1006 = vdwg.mxu0
        %1007 = vmatprep.subr.bf16.mxu0 0
        %1008 = vmatpush1.bf16.msra.mxu0 %v934
        %1009 = vmatprep.subr.bf16.mxu0 0
        %1010 = vmatpush1.bf16.msra.mxu0 %v935
        %1011 = vmatprep.subr.bf16.mxu0 0
        %1012 = vmatpush1.bf16.msra.mxu0 %v936
        %1013 = vmatprep.subr.bf16.mxu0 0
        %1014 = vmatpush1.bf16.msra.mxu0 %v937
        %1015 = vmatprep.subr.bf16.mxu0 0
        %1016 = vmatpush1.bf16.msra.mxu0 %v938
        %1017 = vmatprep.subr.bf16.mxu0 0
        %1018 = vmatpush1.bf16.msra.mxu0 %v939
        %1019 = vmatprep.subr.bf16.mxu0 0
        %1020 = vmatpush1.bf16.msra.mxu0 %v940
        %1021 = vmatprep.subr.bf16.mxu0 0
        %1022 = vmatpush1.bf16.msra.mxu0 %v941
        %1023 = vmatprep.subr.bf16.mxu0 0
        %1024 = vmatpush1.bf16.msra.mxu0 0
        %1025 = vmatprep.subr.bf16.mxu0 0
        %1026 = vmatpush1.bf16.msra.mxu0 0
        %1027 = vmatprep.subr.bf16.mxu0 0
        %1028 = vmatpush1.bf16.msra.mxu0 0
        %1029 = vmatprep.subr.bf16.mxu0 0
        %1030 = vmatpush1.bf16.msra.mxu0 0
        %1031 = vmatprep.subr.bf16.mxu0 0
        %1032 = vmatpush1.bf16.msra.mxu0 0
        %1033 = vmatprep.subr.bf16.mxu0 0
        %1034 = vmatpush1.bf16.msra.mxu0 0
        %1035 = vmatprep.subr.bf16.mxu0 0
        %1036 = vmatpush1.bf16.msra.mxu0 0
        %1037 = vmatprep.subr.bf16.mxu0 0
        %1038 = vmatpush1.bf16.msra.mxu0 0
        %1039 = vmatprep.mubr.bf16.mxu0 0
        %1040 = vmatmul.mubr.bf16.gmra.mrb[0].mxu0 %v766
        %v1041 = vpop.f32.mrb[0].mxu0
        %v1042 = vadd.f32 %v1001, %v1041
        %v1043 = vpop.f32.mrb[0].mxu0
        %v1044 = vpop.f32.mrb[0].mxu0
        %v1045 = vadd.f32 %v1004, %v1044
        %v1046 = vpop.f32.mrb[0].mxu0
        %1047 = vdwg.mxu0
        %v1048 = vld [vmem:[%s3] sm:$0x1]
        %v1049 = vld [vmem:[%s4] sm:$0x1]
        %1050 = vadd.xlane.f32.xlu0 %v1042
        %v1051 = vpop.xlane.xlu0 %1050
        %1052 = vadd.xlane.f32.xlu0 %v1045
        %v1053 = vpop.xlane.xlu0 %1052
        %v1054 = vmul.f32 %v1051, 0.03125
        %v1055 = vmul.f32 %v1053, 0.03125
        %v1056 = vsub.f32 %v1042, %v1054
        %v1057 = vsub.f32 %v1045, %v1055
        %v1058 = vmul.f32 %v1056, %v738
        %v1059 = vmul.f32 %v1057, %v738
        %v1060 = vmul.f32 %v1058, %v1058
        %v1061 = vmul.f32 %v1059, %v1059
        %1062 = vadd.xlane.f32.xlu0 %v1060
        %v1063 = vpop.xlane.xlu0 %1062
        %1064 = vadd.xlane.f32.xlu0 %v1061
        %v1065 = vpop.xlane.xlu0 %1064
        %v1066 = vmul.f32 %v1063, 0.03125
        %v1067 = vmul.f32 %v1065, 0.03125
        %v1068 = vadd.f32 %v1066, 1e-08
        %v1069 = vadd.f32 %v1067, 1e-08
        %v1070 = vrsqrt.pop %v1068
        %v1071 = vrsqrt.pop %v1069
        %v1072 = vmul.f32 %v1058, %v1070
        %v1073 = vmul.f32 %v1059, %v1071
        %v1075 = vlaneseq
        %v1076 = vshrl.u32 %v1075, 7
        %v1077 = vsub.s32 0, %v1076
        %v1078 = vrot.slane %v1048, %v1077
        %v1080 = vmul.f32 %v1072, %v1078
        %v1081 = vmul.f32 %v1073, %v1078
        %v1083 = vlaneseq
        %v1084 = vshrl.u32 %v1083, 7
        %v1085 = vsub.s32 0, %v1084
        %v1086 = vrot.slane %v1049, %v1085
        %v1088 = vadd.f32 %v1080, %v1086
        %v1089 = vadd.f32 %v1081, %v1086
        %v1090 = vmax.f32 %v1088, 0.0
        %v1091 = vmax.f32 %v1089, 0.0
        %v1092 = vld [vmem:[%s9] sm:$0x1]
        %v1094 = vlaneseq
        %v1095 = vshrl.u32 %v1094, 7
        %v1096 = vsub.s32 0, %v1095
        %v1097 = vrot.slane %v1092, %v1096
        %v1099 = vmul.f32 %v1090, %v1097
        %v1100 = vmul.f32 %v1091, %v1097
        %v1101 = vpack.c.bf16 %v1100, %v1099
        %1102 = vst [vmem:[#allocation2] sm:$0x3] 0
        %1103 = vst [vmem:[#allocation2 + $0x8] sm:$0x3] 0
        %1104 = vst [vmem:[#allocation2 + $0x10] sm:$0x3] 0
        %v1106 = vrot.slane %v1101, 6
        %1108 = vst [vmem:[#allocation2] sm:$0xfc] %v1106
        %v1109 = vrot.slane %v1101, 7
        %1111 = vst [vmem:[#allocation2 + $0x8] sm:$0xfe] %v1109
        %1112 = vst [vmem:[#allocation2 + $0x10] sm:$0xff] %v1101
        %v1113 = vld [vmem:[#allocation2] sm:$0xff]
        %v1114 = vld [vmem:[#allocation2 + $0x8] sm:$0xff]
        %v1115 = vld [vmem:[#allocation2 + $0x10] sm:$0xff]
        %v1116 = vld [vmem:[#allocation8] sm:$0xf]
        %v1117 = vld [vmem:[#allocation8 + $0x4] sm:$0xf]
        %v1118 = vld [vmem:[#allocation8 + $0x8] sm:$0xf]
        %v1119 = vld [vmem:[#allocation8 + $0xc] sm:$0xf]
        %v1120 = vld [vmem:[#allocation8 + $0x10] sm:$0xf]
        %v1121 = vld [vmem:[#allocation8 + $0x14] sm:$0xf]
        %v1122 = vld [vmem:[#allocation8 + $0x18] sm:$0xf]
        %v1123 = vld [vmem:[#allocation8 + $0x1c] sm:$0xf]
        %v1124 = vld [vmem:[#allocation8 + $0x20] sm:$0xf]
        %v1125 = vld [vmem:[#allocation8 + $0x24] sm:$0xf]
        %v1126 = vld [vmem:[#allocation8 + $0x28] sm:$0xf]
        %v1127 = vld [vmem:[#allocation8 + $0x2c] sm:$0xf]
        %v1128 = vld [vmem:[#allocation8 + $0x30] sm:$0xf]
        %v1129 = vld [vmem:[#allocation8 + $0x34] sm:$0xf]
        %v1130 = vld [vmem:[#allocation8 + $0x38] sm:$0xf]
        %v1131 = vld [vmem:[#allocation8 + $0x3c] sm:$0xf]
        %v1132 = vld [vmem:[#allocation8 + $0x40] sm:$0xf]
        %v1133 = vld [vmem:[#allocation8 + $0x44] sm:$0xf]
        %v1134 = vld [vmem:[#allocation8 + $0x48] sm:$0xf]
        %v1135 = vld [vmem:[#allocation8 + $0x4c] sm:$0xf]
        %v1136 = vld [vmem:[#allocation8 + $0x50] sm:$0xf]
        %v1137 = vld [vmem:[#allocation8 + $0x54] sm:$0xf]
        %v1138 = vld [vmem:[#allocation8 + $0x58] sm:$0xf]
        %v1139 = vld [vmem:[#allocation8 + $0x5c] sm:$0xf]
        %v1140 = vld [vmem:[#allocation8 + $0x60] sm:$0xf]
        %v1141 = vld [vmem:[#allocation8 + $0x64] sm:$0xf]
        %v1142 = vld [vmem:[#allocation8 + $0x68] sm:$0xf]
        %v1143 = vld [vmem:[#allocation8 + $0x6c] sm:$0xf]
        %v1144 = vld [vmem:[#allocation8 + $0x70] sm:$0xf]
        %v1145 = vld [vmem:[#allocation8 + $0x74] sm:$0xf]
        %v1146 = vld [vmem:[#allocation8 + $0x78] sm:$0xf]
        %v1147 = vld [vmem:[#allocation8 + $0x7c] sm:$0xf]
        %v1148 = vld [vmem:[#allocation8 + $0x80] sm:$0xf]
        %v1149 = vld [vmem:[#allocation8 + $0x84] sm:$0xf]
        %v1150 = vld [vmem:[#allocation8 + $0x88] sm:$0xf]
        %v1151 = vld [vmem:[#allocation8 + $0x8c] sm:$0xf]
        %v1152 = vld [vmem:[#allocation8 + $0x90] sm:$0xf]
        %v1153 = vld [vmem:[#allocation8 + $0x94] sm:$0xf]
        %v1154 = vld [vmem:[#allocation8 + $0x98] sm:$0xf]
        %v1155 = vld [vmem:[#allocation8 + $0x9c] sm:$0xf]
        %v1156 = vld [vmem:[#allocation8 + $0xa0] sm:$0xf]
        %v1157 = vld [vmem:[#allocation8 + $0xa4] sm:$0xf]
        %v1158 = vld [vmem:[#allocation8 + $0xa8] sm:$0xf]
        %v1159 = vld [vmem:[#allocation8 + $0xac] sm:$0xf]
        %v1160 = vld [vmem:[#allocation8 + $0xb0] sm:$0xf]
        %v1161 = vld [vmem:[#allocation8 + $0xb4] sm:$0xf]
        %v1162 = vld [vmem:[#allocation8 + $0xb8] sm:$0xf]
        %v1163 = vld [vmem:[#allocation8 + $0xbc] sm:$0xf]
        %v1164 = vld [vmem:[%s6] sm:$0x1]
        %v1166 = vlaneseq
        %v1167 = vshrl.u32 %v1166, 7
        %v1168 = vsub.s32 0, %v1167
        %v1169 = vrot.slane %v1164, %v1168
        %v1219 = vunpack.c.l.b16 %v1116
        %v1220 = vunpack.c.l.b16 %v1117
        %v1221 = vunpack.c.l.b16 %v1118
        %v1222 = vunpack.c.l.b16 %v1119
        %v1223 = vunpack.c.l.b16 %v1120
        %v1224 = vunpack.c.l.b16 %v1121
        %v1225 = vunpack.c.l.b16 %v1122
        %v1226 = vunpack.c.l.b16 %v1123
        %v1227 = vunpack.c.l.b16 %v1124
        %v1228 = vunpack.c.l.b16 %v1125
        %v1229 = vunpack.c.l.b16 %v1126
        %v1230 = vunpack.c.l.b16 %v1127
        %v1231 = vunpack.c.l.b16 %v1128
        %v1232 = vunpack.c.l.b16 %v1129
        %v1233 = vunpack.c.l.b16 %v1130
        %v1234 = vunpack.c.l.b16 %v1131
        %v1235 = vunpack.c.l.b16 %v1132
        %v1236 = vunpack.c.l.b16 %v1133
        %v1237 = vunpack.c.l.b16 %v1134
        %v1238 = vunpack.c.l.b16 %v1135
        %v1239 = vunpack.c.l.b16 %v1136
        %v1240 = vunpack.c.l.b16 %v1137
        %v1241 = vunpack.c.l.b16 %v1138
        %v1242 = vunpack.c.l.b16 %v1139
        %v1243 = vunpack.c.l.b16 %v1140
        %v1244 = vunpack.c.l.b16 %v1141
        %v1245 = vunpack.c.l.b16 %v1142
        %v1246 = vunpack.c.l.b16 %v1143
        %v1247 = vunpack.c.l.b16 %v1144
        %v1248 = vunpack.c.l.b16 %v1145
        %v1249 = vunpack.c.l.b16 %v1146
        %v1250 = vunpack.c.l.b16 %v1147
        %v1251 = vunpack.c.l.b16 %v1148
        %v1252 = vunpack.c.l.b16 %v1149
        %v1253 = vunpack.c.l.b16 %v1150
        %v1254 = vunpack.c.l.b16 %v1151
        %v1255 = vunpack.c.l.b16 %v1152
        %v1256 = vunpack.c.l.b16 %v1153
        %v1257 = vunpack.c.l.b16 %v1154
        %v1258 = vunpack.c.l.b16 %v1155
        %v1259 = vunpack.c.l.b16 %v1156
        %v1260 = vunpack.c.l.b16 %v1157
        %v1261 = vunpack.c.l.b16 %v1158
        %v1262 = vunpack.c.l.b16 %v1159
        %v1263 = vunpack.c.l.b16 %v1160
        %v1264 = vunpack.c.l.b16 %v1161
        %v1265 = vunpack.c.l.b16 %v1162
        %v1266 = vunpack.c.l.b16 %v1163
        %v1267 = vpack.c.b16 %v1220, %v1219
        %v1268 = vpack.c.b16 %v1222, %v1221
        %v1269 = vpack.c.b16 %v1224, %v1223
        %v1270 = vpack.c.b16 %v1226, %v1225
        %v1271 = vpack.c.b16 %v1228, %v1227
        %v1272 = vpack.c.b16 %v1230, %v1229
        %v1273 = vpack.c.b16 %v1232, %v1231
        %v1274 = vpack.c.b16 %v1234, %v1233
        %v1275 = vpack.c.b16 %v1236, %v1235
        %v1276 = vpack.c.b16 %v1238, %v1237
        %v1277 = vpack.c.b16 %v1240, %v1239
        %v1278 = vpack.c.b16 %v1242, %v1241
        %v1279 = vpack.c.b16 %v1244, %v1243
        %v1280 = vpack.c.b16 %v1246, %v1245
        %v1281 = vpack.c.b16 %v1248, %v1247
        %v1282 = vpack.c.b16 %v1250, %v1249
        %v1283 = vpack.c.b16 %v1252, %v1251
        %v1284 = vpack.c.b16 %v1254, %v1253
        %v1285 = vpack.c.b16 %v1256, %v1255
        %v1286 = vpack.c.b16 %v1258, %v1257
        %v1287 = vpack.c.b16 %v1260, %v1259
        %v1288 = vpack.c.b16 %v1262, %v1261
        %v1289 = vpack.c.b16 %v1264, %v1263
        %v1290 = vpack.c.b16 %v1266, %v1265
        %1315 = vmatprep.subr.bf16.mxu0 0
        %1316 = vmatpush1.bf16.msra.mxu0 %v1267
        %1317 = vmatprep.subr.bf16.mxu0 0
        %1318 = vmatpush1.bf16.msra.mxu0 %v1268
        %1319 = vmatprep.subr.bf16.mxu0 0
        %1320 = vmatpush1.bf16.msra.mxu0 %v1269
        %1321 = vmatprep.subr.bf16.mxu0 0
        %1322 = vmatpush1.bf16.msra.mxu0 %v1270
        %1323 = vmatprep.subr.bf16.mxu0 0
        %1324 = vmatpush1.bf16.msra.mxu0 %v1271
        %1325 = vmatprep.subr.bf16.mxu0 0
        %1326 = vmatpush1.bf16.msra.mxu0 %v1272
        %1327 = vmatprep.subr.bf16.mxu0 0
        %1328 = vmatpush1.bf16.msra.mxu0 %v1273
        %1329 = vmatprep.subr.bf16.mxu0 0
        %1330 = vmatpush1.bf16.msra.mxu0 %v1274
        %1331 = vmatprep.subr.bf16.mxu0 0
        %1332 = vmatpush1.bf16.msra.mxu0 %v1275
        %1333 = vmatprep.subr.bf16.mxu0 0
        %1334 = vmatpush1.bf16.msra.mxu0 %v1276
        %1335 = vmatprep.subr.bf16.mxu0 0
        %1336 = vmatpush1.bf16.msra.mxu0 %v1277
        %1337 = vmatprep.subr.bf16.mxu0 0
        %1338 = vmatpush1.bf16.msra.mxu0 %v1278
        %1339 = vmatprep.subr.bf16.mxu0 0
        %1340 = vmatpush1.bf16.msra.mxu0 %v1279
        %1341 = vmatprep.subr.bf16.mxu0 0
        %1342 = vmatpush1.bf16.msra.mxu0 %v1280
        %1343 = vmatprep.subr.bf16.mxu0 0
        %1344 = vmatpush1.bf16.msra.mxu0 %v1281
        %1345 = vmatprep.subr.bf16.mxu0 0
        %1346 = vmatpush1.bf16.msra.mxu0 %v1282
        %1347 = vmatprep.mubr.bf16.mxu0 %v1114
        %1348 = vmatmul.mubr.bf16.gmra.mrb[0].mxu0 %v1113
        %v1349 = vpop.f32.mrb[0].mxu0
        %v1350 = vadd.f32 %v1169, %v1349
        %v1351 = vpop.f32.mrb[0].mxu0
        %v1352 = vpop.f32.mrb[0].mxu0
        %v1353 = vadd.f32 %v1169, %v1352
        %v1354 = vpop.f32.mrb[0].mxu0
        %1355 = vdwg.mxu0
        %1356 = vmatprep.subr.bf16.mxu0 0
        %1357 = vmatpush1.bf16.msra.mxu0 %v1283
        %1358 = vmatprep.subr.bf16.mxu0 0
        %1359 = vmatpush1.bf16.msra.mxu0 %v1284
        %1360 = vmatprep.subr.bf16.mxu0 0
        %1361 = vmatpush1.bf16.msra.mxu0 %v1285
        %1362 = vmatprep.subr.bf16.mxu0 0
        %1363 = vmatpush1.bf16.msra.mxu0 %v1286
        %1364 = vmatprep.subr.bf16.mxu0 0
        %1365 = vmatpush1.bf16.msra.mxu0 %v1287
        %1366 = vmatprep.subr.bf16.mxu0 0
        %1367 = vmatpush1.bf16.msra.mxu0 %v1288
        %1368 = vmatprep.subr.bf16.mxu0 0
        %1369 = vmatpush1.bf16.msra.mxu0 %v1289
        %1370 = vmatprep.subr.bf16.mxu0 0
        %1371 = vmatpush1.bf16.msra.mxu0 %v1290
        %1372 = vmatprep.subr.bf16.mxu0 0
        %1373 = vmatpush1.bf16.msra.mxu0 0
        %1374 = vmatprep.subr.bf16.mxu0 0
        %1375 = vmatpush1.bf16.msra.mxu0 0
        %1376 = vmatprep.subr.bf16.mxu0 0
        %1377 = vmatpush1.bf16.msra.mxu0 0
        %1378 = vmatprep.subr.bf16.mxu0 0
        %1379 = vmatpush1.bf16.msra.mxu0 0
        %1380 = vmatprep.subr.bf16.mxu0 0
        %1381 = vmatpush1.bf16.msra.mxu0 0
        %1382 = vmatprep.subr.bf16.mxu0 0
        %1383 = vmatpush1.bf16.msra.mxu0 0
        %1384 = vmatprep.subr.bf16.mxu0 0
        %1385 = vmatpush1.bf16.msra.mxu0 0
        %1386 = vmatprep.subr.bf16.mxu0 0
        %1387 = vmatpush1.bf16.msra.mxu0 0
        %1388 = vmatprep.mubr.bf16.mxu0 0
        %1389 = vmatmul.mubr.bf16.gmra.mrb[0].mxu0 %v1115
        %v1390 = vpop.f32.mrb[0].mxu0
        %v1391 = vadd.f32 %v1350, %v1390
        %v1392 = vpop.f32.mrb[0].mxu0
        %v1393 = vpop.f32.mrb[0].mxu0
        %v1394 = vadd.f32 %v1353, %v1393
        %v1395 = vpop.f32.mrb[0].mxu0
        %1396 = vdwg.mxu0
        %v1397 = vld [vmem:[%s7] sm:$0x1]
        %v1398 = vld [vmem:[%s8] sm:$0x1]
        %1399 = vadd.xlane.f32.xlu0 %v1391
        %v1400 = vpop.xlane.xlu0 %1399
        %1401 = vadd.xlane.f32.xlu0 %v1394
        %v1402 = vpop.xlane.xlu0 %1401
        %v1403 = vmul.f32 %v1400, 0.03125
        %v1404 = vmul.f32 %v1402, 0.03125
        %v1405 = vsub.f32 %v1391, %v1403
        %v1406 = vsub.f32 %v1394, %v1404
        %v1407 = vmul.f32 %v1405, %v738
        %v1408 = vmul.f32 %v1406, %v738
        %v1409 = vmul.f32 %v1407, %v1407
        %v1410 = vmul.f32 %v1408, %v1408
        %1411 = vadd.xlane.f32.xlu0 %v1409
        %v1412 = vpop.xlane.xlu0 %1411
        %1413 = vadd.xlane.f32.xlu0 %v1410
        %v1414 = vpop.xlane.xlu0 %1413
        %v1415 = vmul.f32 %v1412, 0.03125
        %v1416 = vmul.f32 %v1414, 0.03125
        %v1417 = vadd.f32 %v1415, 1e-08
        %v1418 = vadd.f32 %v1416, 1e-08
        %v1419 = vrsqrt.pop %v1417
        %v1420 = vrsqrt.pop %v1418
        %v1421 = vmul.f32 %v1407, %v1419
        %v1422 = vmul.f32 %v1408, %v1420
        %v1424 = vlaneseq
        %v1425 = vshrl.u32 %v1424, 7
        %v1426 = vsub.s32 0, %v1425
        %v1427 = vrot.slane %v1397, %v1426
        %v1429 = vmul.f32 %v1421, %v1427
        %v1430 = vmul.f32 %v1422, %v1427
        %v1432 = vlaneseq
        %v1433 = vshrl.u32 %v1432, 7
        %v1434 = vsub.s32 0, %v1433
        %v1435 = vrot.slane %v1398, %v1434
        %v1437 = vadd.f32 %v1429, %v1435
        %v1438 = vadd.f32 %v1430, %v1435
        %v1439 = vmax.f32 %v1437, 0.0
        %v1440 = vmax.f32 %v1438, 0.0
        %v1441 = vld [vmem:[%s10] sm:$0x1]
        %v1443 = vlaneseq
        %v1444 = vshrl.u32 %v1443, 7
        %v1445 = vsub.s32 0, %v1444
        %v1446 = vrot.slane %v1441, %v1445
        %v1448 = vmul.f32 %v1439, %v1446
        %v1449 = vmul.f32 %v1440, %v1446
        %v1450 = vadd.f32 %v739, %v1448
        %v1451 = vadd.f32 %v740, %v1449
        %v1452 = vpack.c.bf16 %v1451, %v1450
        %1453 = vst [vmem:[#allocation2] sm:$0x3] 0
        %1454 = vst [vmem:[#allocation2 + $0x8] sm:$0x3] 0
        %1455 = vst [vmem:[#allocation2 + $0x10] sm:$0x3] 0
        %v1457 = vrot.slane %v1452, 6
        %1459 = vst [vmem:[#allocation2] sm:$0xfc] %v1457
        %v1460 = vrot.slane %v1452, 7
        %1462 = vst [vmem:[#allocation2 + $0x8] sm:$0xfe] %v1460
        %1463 = vst [vmem:[#allocation2 + $0x10] sm:$0xff] %v1452
        %v1464 = vld [vmem:[#allocation2] sm:$0xff]
        %v1465 = vld [vmem:[#allocation2 + $0x8] sm:$0xff]
        %v1466 = vld [vmem:[#allocation2 + $0x10] sm:$0xff]
        %v1467 = vld [vmem:[#allocation9] sm:$0xf]
        %v1468 = vld [vmem:[#allocation9 + $0x4] sm:$0xf]
        %v1469 = vld [vmem:[#allocation9 + $0x8] sm:$0xf]
        %v1470 = vld [vmem:[#allocation9 + $0xc] sm:$0xf]
        %v1471 = vld [vmem:[#allocation9 + $0x10] sm:$0xf]
        %v1472 = vld [vmem:[#allocation9 + $0x14] sm:$0xf]
        %v1473 = vld [vmem:[#allocation9 + $0x18] sm:$0xf]
        %v1474 = vld [vmem:[#allocation9 + $0x1c] sm:$0xf]
        %v1475 = vld [vmem:[#allocation9 + $0x20] sm:$0xf]
        %v1476 = vld [vmem:[#allocation9 + $0x24] sm:$0xf]
        %v1477 = vld [vmem:[#allocation9 + $0x28] sm:$0xf]
        %v1478 = vld [vmem:[#allocation9 + $0x2c] sm:$0xf]
        %v1479 = vld [vmem:[#allocation9 + $0x30] sm:$0xf]
        %v1480 = vld [vmem:[#allocation9 + $0x34] sm:$0xf]
        %v1481 = vld [vmem:[#allocation9 + $0x38] sm:$0xf]
        %v1482 = vld [vmem:[#allocation9 + $0x3c] sm:$0xf]
        %v1483 = vld [vmem:[#allocation9 + $0x40] sm:$0xf]
        %v1484 = vld [vmem:[#allocation9 + $0x44] sm:$0xf]
        %v1485 = vld [vmem:[#allocation9 + $0x48] sm:$0xf]
        %v1486 = vld [vmem:[#allocation9 + $0x4c] sm:$0xf]
        %v1487 = vld [vmem:[#allocation9 + $0x50] sm:$0xf]
        %v1488 = vld [vmem:[#allocation9 + $0x54] sm:$0xf]
        %v1489 = vld [vmem:[#allocation9 + $0x58] sm:$0xf]
        %v1490 = vld [vmem:[#allocation9 + $0x5c] sm:$0xf]
        %v1491 = vld [vmem:[#allocation9 + $0x60] sm:$0xf]
        %v1492 = vld [vmem:[#allocation9 + $0x64] sm:$0xf]
        %v1493 = vld [vmem:[#allocation9 + $0x68] sm:$0xf]
        %v1494 = vld [vmem:[#allocation9 + $0x6c] sm:$0xf]
        %v1495 = vld [vmem:[#allocation9 + $0x70] sm:$0xf]
        %v1496 = vld [vmem:[#allocation9 + $0x74] sm:$0xf]
        %v1497 = vld [vmem:[#allocation9 + $0x78] sm:$0xf]
        %v1498 = vld [vmem:[#allocation9 + $0x7c] sm:$0xf]
        %v1499 = vld [vmem:[#allocation9 + $0x80] sm:$0xf]
        %v1500 = vld [vmem:[#allocation9 + $0x84] sm:$0xf]
        %v1501 = vld [vmem:[#allocation9 + $0x88] sm:$0xf]
        %v1502 = vld [vmem:[#allocation9 + $0x8c] sm:$0xf]
        %v1503 = vld [vmem:[#allocation9 + $0x90] sm:$0xf]
        %v1504 = vld [vmem:[#allocation9 + $0x94] sm:$0xf]
        %v1505 = vld [vmem:[#allocation9 + $0x98] sm:$0xf]
        %v1506 = vld [vmem:[#allocation9 + $0x9c] sm:$0xf]
        %v1507 = vld [vmem:[#allocation9 + $0xa0] sm:$0xf]
        %v1508 = vld [vmem:[#allocation9 + $0xa4] sm:$0xf]
        %v1509 = vld [vmem:[#allocation9 + $0xa8] sm:$0xf]
        %v1510 = vld [vmem:[#allocation9 + $0xac] sm:$0xf]
        %v1511 = vld [vmem:[#allocation9 + $0xb0] sm:$0xf]
        %v1512 = vld [vmem:[#allocation9 + $0xb4] sm:$0xf]
        %v1513 = vld [vmem:[#allocation9 + $0xb8] sm:$0xf]
        %v1514 = vld [vmem:[#allocation9 + $0xbc] sm:$0xf]
        %v1515 = vld [vmem:[%s12] sm:$0x1]
        %v1517 = vlaneseq
        %v1518 = vshrl.u32 %v1517, 7
        %v1519 = vsub.s32 0, %v1518
        %v1520 = vrot.slane %v1515, %v1519
        %v1570 = vunpack.c.l.b16 %v1467
        %v1571 = vunpack.c.l.b16 %v1468
        %v1572 = vunpack.c.l.b16 %v1469
        %v1573 = vunpack.c.l.b16 %v1470
        %v1574 = vunpack.c.l.b16 %v1471
        %v1575 = vunpack.c.l.b16 %v1472
        %v1576 = vunpack.c.l.b16 %v1473
        %v1577 = vunpack.c.l.b16 %v1474
        %v1578 = vunpack.c.l.b16 %v1475
        %v1579 = vunpack.c.l.b16 %v1476
        %v1580 = vunpack.c.l.b16 %v1477
        %v1581 = vunpack.c.l.b16 %v1478
        %v1582 = vunpack.c.l.b16 %v1479
        %v1583 = vunpack.c.l.b16 %v1480
        %v1584 = vunpack.c.l.b16 %v1481
        %v1585 = vunpack.c.l.b16 %v1482
        %v1586 = vunpack.c.l.b16 %v1483
        %v1587 = vunpack.c.l.b16 %v1484
        %v1588 = vunpack.c.l.b16 %v1485
        %v1589 = vunpack.c.l.b16 %v1486
        %v1590 = vunpack.c.l.b16 %v1487
        %v1591 = vunpack.c.l.b16 %v1488
        %v1592 = vunpack.c.l.b16 %v1489
        %v1593 = vunpack.c.l.b16 %v1490
        %v1594 = vunpack.c.l.b16 %v1491
        %v1595 = vunpack.c.l.b16 %v1492
        %v1596 = vunpack.c.l.b16 %v1493
        %v1597 = vunpack.c.l.b16 %v1494
        %v1598 = vunpack.c.l.b16 %v1495
        %v1599 = vunpack.c.l.b16 %v1496
        %v1600 = vunpack.c.l.b16 %v1497
        %v1601 = vunpack.c.l.b16 %v1498
        %v1602 = vunpack.c.l.b16 %v1499
        %v1603 = vunpack.c.l.b16 %v1500
        %v1604 = vunpack.c.l.b16 %v1501
        %v1605 = vunpack.c.l.b16 %v1502
        %v1606 = vunpack.c.l.b16 %v1503
        %v1607 = vunpack.c.l.b16 %v1504
        %v1608 = vunpack.c.l.b16 %v1505
        %v1609 = vunpack.c.l.b16 %v1506
        %v1610 = vunpack.c.l.b16 %v1507
        %v1611 = vunpack.c.l.b16 %v1508
        %v1612 = vunpack.c.l.b16 %v1509
        %v1613 = vunpack.c.l.b16 %v1510
        %v1614 = vunpack.c.l.b16 %v1511
        %v1615 = vunpack.c.l.b16 %v1512
        %v1616 = vunpack.c.l.b16 %v1513
        %v1617 = vunpack.c.l.b16 %v1514
        %v1618 = vpack.c.b16 %v1571, %v1570
        %v1619 = vpack.c.b16 %v1573, %v1572
        %v1620 = vpack.c.b16 %v1575, %v1574
        %v1621 = vpack.c.b16 %v1577, %v1576
        %v1622 = vpack.c.b16 %v1579, %v1578
        %v1623 = vpack.c.b16 %v1581, %v1580
        %v1624 = vpack.c.b16 %v1583, %v1582
        %v1625 = vpack.c.b16 %v1585, %v1584
        %v1626 = vpack.c.b16 %v1587, %v1586
        %v1627 = vpack.c.b16 %v1589, %v1588
        %v1628 = vpack.c.b16 %v1591, %v1590
        %v1629 = vpack.c.b16 %v1593, %v1592
        %v1630 = vpack.c.b16 %v1595, %v1594
        %v1631 = vpack.c.b16 %v1597, %v1596
        %v1632 = vpack.c.b16 %v1599, %v1598
        %v1633 = vpack.c.b16 %v1601, %v1600
        %v1634 = vpack.c.b16 %v1603, %v1602
        %v1635 = vpack.c.b16 %v1605, %v1604
        %v1636 = vpack.c.b16 %v1607, %v1606
        %v1637 = vpack.c.b16 %v1609, %v1608
        %v1638 = vpack.c.b16 %v1611, %v1610
        %v1639 = vpack.c.b16 %v1613, %v1612
        %v1640 = vpack.c.b16 %v1615, %v1614
        %v1641 = vpack.c.b16 %v1617, %v1616
        %1666 = vmatprep.subr.bf16.mxu0 0
        %1667 = vmatpush1.bf16.msra.mxu0 %v1618
        %1668 = vmatprep.subr.bf16.mxu0 0
        %1669 = vmatpush1.bf16.msra.mxu0 %v1619
        %1670 = vmatprep.subr.bf16.mxu0 0
        %1671 = vmatpush1.bf16.msra.mxu0 %v1620
        %1672 = vmatprep.subr.bf16.mxu0 0
        %1673 = vmatpush1.bf16.msra.mxu0 %v1621
        %1674 = vmatprep.subr.bf16.mxu0 0
        %1675 = vmatpush1.bf16.msra.mxu0 %v1622
        %1676 = vmatprep.subr.bf16.mxu0 0
        %1677 = vmatpush1.bf16.msra.mxu0 %v1623
        %1678 = vmatprep.subr.bf16.mxu0 0
        %1679 = vmatpush1.bf16.msra.mxu0 %v1624
        %1680 = vmatprep.subr.bf16.mxu0 0
        %1681 = vmatpush1.bf16.msra.mxu0 %v1625
        %1682 = vmatprep.subr.bf16.mxu0 0
        %1683 = vmatpush1.bf16.msra.mxu0 %v1626
        %1684 = vmatprep.subr.bf16.mxu0 0
        %1685 = vmatpush1.bf16.msra.mxu0 %v1627
        %1686 = vmatprep.subr.bf16.mxu0 0
        %1687 = vmatpush1.bf16.msra.mxu0 %v1628
        %1688 = vmatprep.subr.bf16.mxu0 0
        %1689 = vmatpush1.bf16.msra.mxu0 %v1629
        %1690 = vmatprep.subr.bf16.mxu0 0
        %1691 = vmatpush1.bf16.msra.mxu0 %v1630
        %1692 = vmatprep.subr.bf16.mxu0 0
        %1693 = vmatpush1.bf16.msra.mxu0 %v1631
        %1694 = vmatprep.subr.bf16.mxu0 0
        %1695 = vmatpush1.bf16.msra.mxu0 %v1632
        %1696 = vmatprep.subr.bf16.mxu0 0
        %1697 = vmatpush1.bf16.msra.mxu0 %v1633
        %1698 = vmatprep.mubr.bf16.mxu0 %v1465
        %1699 = vmatmul.mubr.bf16.gmra.mrb[0].mxu0 %v1464
        %v1700 = vpop.f32.mrb[0].mxu0
        %v1701 = vadd.f32 %v1520, %v1700
        %v1702 = vpop.f32.mrb[0].mxu0
        %v1703 = vpop.f32.mrb[0].mxu0
        %v1704 = vadd.f32 %v1520, %v1703
        %v1705 = vpop.f32.mrb[0].mxu0
        %1706 = vdwg.mxu0
        %1707 = vmatprep.subr.bf16.mxu0 0
        %1708 = vmatpush1.bf16.msra.mxu0 %v1634
        %1709 = vmatprep.subr.bf16.mxu0 0
        %1710 = vmatpush1.bf16.msra.mxu0 %v1635
        %1711 = vmatprep.subr.bf16.mxu0 0
        %1712 = vmatpush1.bf16.msra.mxu0 %v1636
        %1713 = vmatprep.subr.bf16.mxu0 0
        %1714 = vmatpush1.bf16.msra.mxu0 %v1637
        %1715 = vmatprep.subr.bf16.mxu0 0
        %1716 = vmatpush1.bf16.msra.mxu0 %v1638
        %1717 = vmatprep.subr.bf16.mxu0 0
        %1718 = vmatpush1.bf16.msra.mxu0 %v1639
        %1719 = vmatprep.subr.bf16.mxu0 0
        %1720 = vmatpush1.bf16.msra.mxu0 %v1640
        %1721 = vmatprep.subr.bf16.mxu0 0
        %1722 = vmatpush1.bf16.msra.mxu0 %v1641
        %1723 = vmatprep.subr.bf16.mxu0 0
        %1724 = vmatpush1.bf16.msra.mxu0 0
        %1725 = vmatprep.subr.bf16.mxu0 0
        %1726 = vmatpush1.bf16.msra.mxu0 0
        %1727 = vmatprep.subr.bf16.mxu0 0
        %1728 = vmatpush1.bf16.msra.mxu0 0
        %1729 = vmatprep.subr.bf16.mxu0 0
        %1730 = vmatpush1.bf16.msra.mxu0 0
        %1731 = vmatprep.subr.bf16.mxu0 0
        %1732 = vmatpush1.bf16.msra.mxu0 0
        %1733 = vmatprep.subr.bf16.mxu0 0
        %1734 = vmatpush1.bf16.msra.mxu0 0
        %1735 = vmatprep.subr.bf16.mxu0 0
        %1736 = vmatpush1.bf16.msra.mxu0 0
        %1737 = vmatprep.subr.bf16.mxu0 0
        %1738 = vmatpush1.bf16.msra.mxu0 0
        %1739 = vmatprep.mubr.bf16.mxu0 0
        %1740 = vmatmul.mubr.bf16.gmra.mrb[0].mxu0 %v1466
        %v1741 = vpop.f32.mrb[0].mxu0
        %v1742 = vadd.f32 %v1701, %v1741
        %v1743 = vpop.f32.mrb[0].mxu0
        %v1744 = vpop.f32.mrb[0].mxu0
        %v1745 = vadd.f32 %v1704, %v1744
        %v1746 = vpop.f32.mrb[0].mxu0
        %1747 = vdwg.mxu0
        %v1748 = vld [vmem:[%s13] sm:$0x1]
        %v1749 = vld [vmem:[%s14] sm:$0x1]
        %1750 = vadd.xlane.f32.xlu0 %v1742
        %v1751 = vpop.xlane.xlu0 %1750
        %1752 = vadd.xlane.f32.xlu0 %v1745
        %v1753 = vpop.xlane.xlu0 %1752
        %v1754 = vmul.f32 %v1751, 0.03125
        %v1755 = vmul.f32 %v1753, 0.03125
        %v1756 = vsub.f32 %v1742, %v1754
        %v1757 = vsub.f32 %v1745, %v1755
        %v1758 = vmul.f32 %v1756, %v738
        %v1759 = vmul.f32 %v1757, %v738
        %v1760 = vmul.f32 %v1758, %v1758
        %v1761 = vmul.f32 %v1759, %v1759
        %1762 = vadd.xlane.f32.xlu0 %v1760
        %v1763 = vpop.xlane.xlu0 %1762
        %1764 = vadd.xlane.f32.xlu0 %v1761
        %v1765 = vpop.xlane.xlu0 %1764
        %v1766 = vmul.f32 %v1763, 0.03125
        %v1767 = vmul.f32 %v1765, 0.03125
        %v1768 = vadd.f32 %v1766, 1e-08
        %v1769 = vadd.f32 %v1767, 1e-08
        %v1770 = vrsqrt.pop %v1768
        %v1771 = vrsqrt.pop %v1769
        %v1772 = vmul.f32 %v1758, %v1770
        %v1773 = vmul.f32 %v1759, %v1771
        %v1775 = vlaneseq
        %v1776 = vshrl.u32 %v1775, 7
        %v1777 = vsub.s32 0, %v1776
        %v1778 = vrot.slane %v1748, %v1777
        %v1780 = vmul.f32 %v1772, %v1778
        %v1781 = vmul.f32 %v1773, %v1778
        %v1783 = vlaneseq
        %v1784 = vshrl.u32 %v1783, 7
        %v1785 = vsub.s32 0, %v1784
        %v1786 = vrot.slane %v1749, %v1785
        %v1788 = vadd.f32 %v1780, %v1786
        %v1789 = vadd.f32 %v1781, %v1786
        %v1790 = vmax.f32 %v1788, 0.0
        %v1791 = vmax.f32 %v1789, 0.0
        %v1792 = vld [vmem:[%s19] sm:$0x1]
        %v1794 = vlaneseq
        %v1795 = vshrl.u32 %v1794, 7
        %v1796 = vsub.s32 0, %v1795
        %v1797 = vrot.slane %v1792, %v1796
        %v1799 = vmul.f32 %v1790, %v1797
        %v1800 = vmul.f32 %v1791, %v1797
        %v1801 = vpack.c.bf16 %v1800, %v1799
        %1802 = vst [vmem:[#allocation2] sm:$0xf] 0
        %1803 = vst [vmem:[#allocation2 + $0x8] sm:$0xf] 0
        %1804 = vst [vmem:[#allocation2 + $0x10] sm:$0xf] 0
        %v1806 = vrot.slane %v1801, 4
        %1808 = vst [vmem:[#allocation2] sm:$0xf0] %v1806
        %v1809 = vrot.slane %v1801, 6
        %1811 = vst [vmem:[#allocation2 + $0x8] sm:$0xfc] %v1809
        %1812 = vst [vmem:[#allocation2 + $0x10] sm:$0xff] %v1801
        %v1813 = vld [vmem:[#allocation2] sm:$0xff]
        %v1814 = vld [vmem:[#allocation2 + $0x8] sm:$0xff]
        %v1815 = vld [vmem:[#allocation2 + $0x10] sm:$0xff]
        %v1816 = vld [vmem:[#allocation11] sm:$0xf]
        %v1817 = vld [vmem:[#allocation11 + $0x4] sm:$0xf]
        %v1818 = vld [vmem:[#allocation11 + $0x8] sm:$0xf]
        %v1819 = vld [vmem:[#allocation11 + $0xc] sm:$0xf]
        %v1820 = vld [vmem:[#allocation11 + $0x10] sm:$0xf]
        %v1821 = vld [vmem:[#allocation11 + $0x14] sm:$0xf]
        %v1822 = vld [vmem:[#allocation11 + $0x18] sm:$0xf]
        %v1823 = vld [vmem:[#allocation11 + $0x1c] sm:$0xf]
        %v1824 = vld [vmem:[#allocation11 + $0x20] sm:$0xf]
        %v1825 = vld [vmem:[#allocation11 + $0x24] sm:$0xf]
        %v1826 = vld [vmem:[#allocation11 + $0x28] sm:$0xf]
        %v1827 = vld [vmem:[#allocation11 + $0x2c] sm:$0xf]
        %v1828 = vld [vmem:[#allocation11 + $0x30] sm:$0xf]
        %v1829 = vld [vmem:[#allocation11 + $0x34] sm:$0xf]
        %v1830 = vld [vmem:[#allocation11 + $0x38] sm:$0xf]
        %v1831 = vld [vmem:[#allocation11 + $0x3c] sm:$0xf]
        %v1832 = vld [vmem:[#allocation11 + $0x40] sm:$0xf]
        %v1833 = vld [vmem:[#allocation11 + $0x44] sm:$0xf]
        %v1834 = vld [vmem:[#allocation11 + $0x48] sm:$0xf]
        %v1835 = vld [vmem:[#allocation11 + $0x4c] sm:$0xf]
        %v1836 = vld [vmem:[#allocation11 + $0x50] sm:$0xf]
        %v1837 = vld [vmem:[#allocation11 + $0x54] sm:$0xf]
        %v1838 = vld [vmem:[#allocation11 + $0x58] sm:$0xf]
        %v1839 = vld [vmem:[#allocation11 + $0x5c] sm:$0xf]
        %v1840 = vld [vmem:[#allocation11 + $0x60] sm:$0xf]
        %v1841 = vld [vmem:[#allocation11 + $0x64] sm:$0xf]
        %v1842 = vld [vmem:[#allocation11 + $0x68] sm:$0xf]
        %v1843 = vld [vmem:[#allocation11 + $0x6c] sm:$0xf]
        %v1844 = vld [vmem:[#allocation11 + $0x70] sm:$0xf]
        %v1845 = vld [vmem:[#allocation11 + $0x74] sm:$0xf]
        %v1846 = vld [vmem:[#allocation11 + $0x78] sm:$0xf]
        %v1847 = vld [vmem:[#allocation11 + $0x7c] sm:$0xf]
        %v1848 = vld [vmem:[#allocation11 + $0x80] sm:$0xf]
        %v1849 = vld [vmem:[#allocation11 + $0x84] sm:$0xf]
        %v1850 = vld [vmem:[#allocation11 + $0x88] sm:$0xf]
        %v1851 = vld [vmem:[#allocation11 + $0x8c] sm:$0xf]
        %v1852 = vld [vmem:[#allocation11 + $0x90] sm:$0xf]
        %v1853 = vld [vmem:[#allocation11 + $0x94] sm:$0xf]
        %v1854 = vld [vmem:[#allocation11 + $0x98] sm:$0xf]
        %v1855 = vld [vmem:[#allocation11 + $0x9c] sm:$0xf]
        %v1856 = vld [vmem:[#allocation11 + $0xa0] sm:$0xf]
        %v1857 = vld [vmem:[#allocation11 + $0xa4] sm:$0xf]
        %v1858 = vld [vmem:[#allocation11 + $0xa8] sm:$0xf]
        %v1859 = vld [vmem:[#allocation11 + $0xac] sm:$0xf]
        %v1860 = vld [vmem:[#allocation11 + $0xb0] sm:$0xf]
        %v1861 = vld [vmem:[#allocation11 + $0xb4] sm:$0xf]
        %v1862 = vld [vmem:[#allocation11 + $0xb8] sm:$0xf]
        %v1863 = vld [vmem:[#allocation11 + $0xbc] sm:$0xf]
        %v1864 = vld [vmem:[%s16] sm:$0x1]
        %v1866 = vlaneseq
        %v1867 = vshrl.u32 %v1866, 7
        %v1868 = vsub.s32 0, %v1867
        %v1869 = vrot.slane %v1864, %v1868
        %v1919 = vunpack.c.l.b16 %v1816
        %v1920 = vunpack.c.l.b16 %v1817
        %v1921 = vunpack.c.l.b16 %v1818
        %v1922 = vunpack.c.l.b16 %v1819
        %v1923 = vunpack.c.l.b16 %v1820
        %v1924 = vunpack.c.l.b16 %v1821
        %v1925 = vunpack.c.l.b16 %v1822
        %v1926 = vunpack.c.l.b16 %v1823
        %v1927 = vunpack.c.l.b16 %v1824
        %v1928 = vunpack.c.l.b16 %v1825
        %v1929 = vunpack.c.l.b16 %v1826
        %v1930 = vunpack.c.l.b16 %v1827
        %v1931 = vunpack.c.l.b16 %v1828
        %v1932 = vunpack.c.l.b16 %v1829
        %v1933 = vunpack.c.l.b16 %v1830
        %v1934 = vunpack.c.l.b16 %v1831
        %v1935 = vunpack.c.l.b16 %v1832
        %v1936 = vunpack.c.l.b16 %v1833
        %v1937 = vunpack.c.l.b16 %v1834
        %v1938 = vunpack.c.l.b16 %v1835
        %v1939 = vunpack.c.l.b16 %v1836
        %v1940 = vunpack.c.l.b16 %v1837
        %v1941 = vunpack.c.l.b16 %v1838
        %v1942 = vunpack.c.l.b16 %v1839
        %v1943 = vunpack.c.l.b16 %v1840
        %v1944 = vunpack.c.l.b16 %v1841
        %v1945 = vunpack.c.l.b16 %v1842
        %v1946 = vunpack.c.l.b16 %v1843
        %v1947 = vunpack.c.l.b16 %v1844
        %v1948 = vunpack.c.l.b16 %v1845
        %v1949 = vunpack.c.l.b16 %v1846
        %v1950 = vunpack.c.l.b16 %v1847
        %v1951 = vunpack.c.l.b16 %v1848
        %v1952 = vunpack.c.l.b16 %v1849
        %v1953 = vunpack.c.l.b16 %v1850
        %v1954 = vunpack.c.l.b16 %v1851
        %v1955 = vunpack.c.l.b16 %v1852
        %v1956 = vunpack.c.l.b16 %v1853
        %v1957 = vunpack.c.l.b16 %v1854
        %v1958 = vunpack.c.l.b16 %v1855
        %v1959 = vunpack.c.l.b16 %v1856
        %v1960 = vunpack.c.l.b16 %v1857
        %v1961 = vunpack.c.l.b16 %v1858
        %v1962 = vunpack.c.l.b16 %v1859
        %v1963 = vunpack.c.l.b16 %v1860
        %v1964 = vunpack.c.l.b16 %v1861
        %v1965 = vunpack.c.l.b16 %v1862
        %v1966 = vunpack.c.l.b16 %v1863
        %v1967 = vpack.c.b16 %v1920, %v1919
        %v1968 = vpack.c.b16 %v1922, %v1921
        %v1969 = vpack.c.b16 %v1924, %v1923
        %v1970 = vpack.c.b16 %v1926, %v1925
        %v1971 = vpack.c.b16 %v1928, %v1927
        %v1972 = vpack.c.b16 %v1930, %v1929
        %v1973 = vpack.c.b16 %v1932, %v1931
        %v1974 = vpack.c.b16 %v1934, %v1933
        %v1975 = vpack.c.b16 %v1936, %v1935
        %v1976 = vpack.c.b16 %v1938, %v1937
        %v1977 = vpack.c.b16 %v1940, %v1939
        %v1978 = vpack.c.b16 %v1942, %v1941
        %v1979 = vpack.c.b16 %v1944, %v1943
        %v1980 = vpack.c.b16 %v1946, %v1945
        %v1981 = vpack.c.b16 %v1948, %v1947
        %v1982 = vpack.c.b16 %v1950, %v1949
        %v1983 = vpack.c.b16 %v1952, %v1951
        %v1984 = vpack.c.b16 %v1954, %v1953
        %v1985 = vpack.c.b16 %v1956, %v1955
        %v1986 = vpack.c.b16 %v1958, %v1957
        %v1987 = vpack.c.b16 %v1960, %v1959
        %v1988 = vpack.c.b16 %v1962, %v1961
        %v1989 = vpack.c.b16 %v1964, %v1963
        %v1990 = vpack.c.b16 %v1966, %v1965
        %2015 = vmatprep.subr.bf16.mxu0 0
        %2016 = vmatpush1.bf16.msra.mxu0 %v1967
        %2017 = vmatprep.subr.bf16.mxu0 0
        %2018 = vmatpush1.bf16.msra.mxu0 %v1968
        %2019 = vmatprep.subr.bf16.mxu0 0
        %2020 = vmatpush1.bf16.msra.mxu0 %v1969
        %2021 = vmatprep.subr.bf16.mxu0 0
        %2022 = vmatpush1.bf16.msra.mxu0 %v1970
        %2023 = vmatprep.subr.bf16.mxu0 0
        %2024 = vmatpush1.bf16.msra.mxu0 %v1971
        %2025 = vmatprep.subr.bf16.mxu0 0
        %2026 = vmatpush1.bf16.msra.mxu0 %v1972
        %2027 = vmatprep.subr.bf16.mxu0 0
        %2028 = vmatpush1.bf16.msra.mxu0 %v1973
        %2029 = vmatprep.subr.bf16.mxu0 0
        %2030 = vmatpush1.bf16.msra.mxu0 %v1974
        %2031 = vmatprep.subr.bf16.mxu0 0
        %2032 = vmatpush1.bf16.msra.mxu0 %v1975
        %2033 = vmatprep.subr.bf16.mxu0 0
        %2034 = vmatpush1.bf16.msra.mxu0 %v1976
        %2035 = vmatprep.subr.bf16.mxu0 0
        %2036 = vmatpush1.bf16.msra.mxu0 %v1977
        %2037 = vmatprep.subr.bf16.mxu0 0
        %2038 = vmatpush1.bf16.msra.mxu0 %v1978
        %2039 = vmatprep.subr.bf16.mxu0 0
        %2040 = vmatpush1.bf16.msra.mxu0 %v1979
        %2041 = vmatprep.subr.bf16.mxu0 0
        %2042 = vmatpush1.bf16.msra.mxu0 %v1980
        %2043 = vmatprep.subr.bf16.mxu0 0
        %2044 = vmatpush1.bf16.msra.mxu0 %v1981
        %2045 = vmatprep.subr.bf16.mxu0 0
        %2046 = vmatpush1.bf16.msra.mxu0 %v1982
        %2047 = vmatprep.mubr.bf16.mxu0 %v1814
        %2048 = vmatmul.mubr.bf16.gmra.mrb[0].mxu0 %v1813
        %v2049 = vpop.f32.mrb[0].mxu0
        %v2050 = vadd.f32 %v1869, %v2049
        %v2051 = vpop.f32.mrb[0].mxu0
        %v2052 = vpop.f32.mrb[0].mxu0
        %v2053 = vadd.f32 %v1869, %v2052
        %v2054 = vpop.f32.mrb[0].mxu0
        %2055 = vdwg.mxu0
        %2056 = vmatprep.subr.bf16.mxu0 0
        %2057 = vmatpush1.bf16.msra.mxu0 %v1983
        %2058 = vmatprep.subr.bf16.mxu0 0
        %2059 = vmatpush1.bf16.msra.mxu0 %v1984
        %2060 = vmatprep.subr.bf16.mxu0 0
        %2061 = vmatpush1.bf16.msra.mxu0 %v1985
        %2062 = vmatprep.subr.bf16.mxu0 0
        %2063 = vmatpush1.bf16.msra.mxu0 %v1986
        %2064 = vmatprep.subr.bf16.mxu0 0
        %2065 = vmatpush1.bf16.msra.mxu0 %v1987
        %2066 = vmatprep.subr.bf16.mxu0 0
        %2067 = vmatpush1.bf16.msra.mxu0 %v1988
        %2068 = vmatprep.subr.bf16.mxu0 0
        %2069 = vmatpush1.bf16.msra.mxu0 %v1989
        %2070 = vmatprep.subr.bf16.mxu0 0
        %2071 = vmatpush1.bf16.msra.mxu0 %v1990
        %2072 = vmatprep.subr.bf16.mxu0 0
        %2073 = vmatpush1.bf16.msra.mxu0 0
        %2074 = vmatprep.subr.bf16.mxu0 0
        %2075 = vmatpush1.bf16.msra.mxu0 0
        %2076 = vmatprep.subr.bf16.mxu0 0
        %2077 = vmatpush1.bf16.msra.mxu0 0
        %2078 = vmatprep.subr.bf16.mxu0 0
        %2079 = vmatpush1.bf16.msra.mxu0 0
        %2080 = vmatprep.subr.bf16.mxu0 0
        %2081 = vmatpush1.bf16.msra.mxu0 0
        %2082 = vmatprep.subr.bf16.mxu0 0
        %2083 = vmatpush1.bf16.msra.mxu0 0
        %2084 = vmatprep.subr.bf16.mxu0 0
        %2085 = vmatpush1.bf16.msra.mxu0 0
        %2086 = vmatprep.subr.bf16.mxu0 0
        %2087 = vmatpush1.bf16.msra.mxu0 0
        %2088 = vmatprep.mubr.bf16.mxu0 0
        %2089 = vmatmul.mubr.bf16.gmra.mrb[0].mxu0 %v1815
        %v2090 = vpop.f32.mrb[0].mxu0
        %v2091 = vadd.f32 %v2050, %v2090
        %v2092 = vpop.f32.mrb[0].mxu0
        %v2093 = vpop.f32.mrb[0].mxu0
        %v2094 = vadd.f32 %v2053, %v2093
        %v2095 = vpop.f32.mrb[0].mxu0
        %2096 = vdwg.mxu0
        %v2097 = vld [vmem:[%s17] sm:$0x1]
        %v2098 = vld [vmem:[%s18] sm:$0x1]
        %2099 = vadd.xlane.f32.xlu0 %v2091
        %v2100 = vpop.xlane.xlu0 %2099
        %2101 = vadd.xlane.f32.xlu0 %v2094
        %v2102 = vpop.xlane.xlu0 %2101
        %v2103 = vmul.f32 %v2100, 0.03125
        %v2104 = vmul.f32 %v2102, 0.03125
        %v2105 = vsub.f32 %v2091, %v2103
        %v2106 = vsub.f32 %v2094, %v2104
        %v2107 = vmul.f32 %v2105, %v738
        %v2108 = vmul.f32 %v2106, %v738
        %v2109 = vmul.f32 %v2107, %v2107
        %v2110 = vmul.f32 %v2108, %v2108
        %2111 = vadd.xlane.f32.xlu0 %v2109
        %v2112 = vpop.xlane.xlu0 %2111
        %2113 = vadd.xlane.f32.xlu0 %v2110
        %v2114 = vpop.xlane.xlu0 %2113
        %v2115 = vmul.f32 %v2112, 0.03125
        %v2116 = vmul.f32 %v2114, 0.03125
        %v2117 = vadd.f32 %v2115, 1e-08
        %v2118 = vadd.f32 %v2116, 1e-08
        %v2119 = vrsqrt.pop %v2117
        %v2120 = vrsqrt.pop %v2118
        %v2121 = vmul.f32 %v2107, %v2119
        %v2122 = vmul.f32 %v2108, %v2120
        %v2124 = vlaneseq
        %v2125 = vshrl.u32 %v2124, 7
        %v2126 = vsub.s32 0, %v2125
        %v2127 = vrot.slane %v2097, %v2126
        %v2129 = vmul.f32 %v2121, %v2127
        %v2130 = vmul.f32 %v2122, %v2127
        %v2132 = vlaneseq
        %v2133 = vshrl.u32 %v2132, 7
        %v2134 = vsub.s32 0, %v2133
        %v2135 = vrot.slane %v2098, %v2134
        %v2137 = vadd.f32 %v2129, %v2135
        %v2138 = vadd.f32 %v2130, %v2135
        %v2139 = vmax.f32 %v2137, 0.0
        %v2140 = vmax.f32 %v2138, 0.0
        %v2141 = vld [vmem:[%s20] sm:$0x1]
        %v2143 = vlaneseq
        %v2144 = vshrl.u32 %v2143, 7
        %v2145 = vsub.s32 0, %v2144
        %v2146 = vrot.slane %v2141, %v2145
        %v2148 = vmul.f32 %v2139, %v2146
        %v2149 = vmul.f32 %v2140, %v2146
        %v2150 = vadd.f32 %v1450, %v2148
        %v2151 = vadd.f32 %v1451, %v2149
        %2152 = vst [vmem:[%s732] sm:$0xff] %v2150
        %2153 = vst [vmem:[%s732 + $0x8] sm:$0xff] %v2151
        %s2154 = sand.u32 %s494, 1
        %s2155 = scalar_lea.sflag [#allocation5], %s2154
        %s2156 = sand.u32 %s494, 1
        %s2157 = smul.addr %s2156, 16
        %s2158 = scalar_lea.vmem [#allocation12], %s2157
        // Predicated region
        $region125: #{tpu_custom_call.1} parent=103 // pred_check
          %p2159 = pneg %p504
        $region126: #{tpu_custom_call.1} parent=103 // pred_check_branch
          %2161 = sbr.rel (%p2159) target = $region128
        $region127: #{tpu_custom_call.1} parent=103 // pred_region
          %s2163 = ssub.s32 256, 256
          %2164 = vsyncadd %s2155, %s2163
          %s2165 = smul.addr %s40, 2
          %s2166 = smul.addr %s2165, 128
          %s2167 = scalar_lea.hbm %s21, %s2166
          %s2168 = sshll.u32 %s2158, 4
          %s2169 = int_to_ptr.vmem [resolvable:$true] %s2168
          %2174 = dma.vmem_to_hbm [thread:$0]  %s2169, 256, %s2167, %s2155, 128, 128, 8
        $region128: #{tpu_custom_call.1} parent=103 // pred_fallthru
          _
      $region104: #{tpu_custom_call.1} parent=5 // pred_fallthru
        _
      %p2175 = scmp.le.s32.totalorder 2, %s35
      // Predicated region
      $region129: #{tpu_custom_call.1} parent=5 // pred_check
        %p2176 = pneg %p2175
      $region130: #{tpu_custom_call.1} parent=5 // pred_check_branch
        %2178 = sbr.rel (%p2176) target = $region132
      $region131: #{tpu_custom_call.1} parent=5 // pred_region
        %s2179 = ssub.s32 %s35, 2
        // Predicated region
        $region133: #{tpu_custom_call.1} parent=131 // pred_check
          %p2180 = pneg %p510
        $region134: #{tpu_custom_call.1} parent=131 // pred_check_branch
          %2182 = sbr.rel (%p2180) target = $region136
        $region135: #{tpu_custom_call.1} parent=131 // pred_region
          %s2183 = sand.u32 %s495, 1
          %s2184 = scalar_lea.sflag [#allocation5], %s2183
          %s2185 = sand.u32 %s495, 1
          %s2186 = smul.addr %s2185, 16
          %s2187 = scalar_lea.vmem [#allocation12], %s2186
          %2188 = dma.done %s2184, 256
        $region136: #{tpu_custom_call.1} parent=131 // pred_fallthru
          _
      $region132: #{tpu_custom_call.1} parent=5 // pred_fallthru
        _
    $region6: #{tpu_custom_call.1} parent=1 // loop_footer
      %s39 = sadd.s32 1, %s35
    $region7: #{tpu_custom_call.1} parent=1 // loop_footer_branch
      %34 = sbr.rel target = $region3
    $region8: #{tpu_custom_call.1} parent=1 // loop_exit
      _
    %2189 = vsyncpa [#allocation4], 1
    %s2190 = scalar_lea.sflag [#allocation4], 1
    %2191 = vsyncpa %s2190, 1
    %2192 = vsyncpa [#allocation7], 1
    %2193 = vsyncpa [#allocation10], 1
    %2194 = vsyncpa [#allocation5], 1
    %s2195 = scalar_lea.sflag [#allocation5], 1
    %2196 = vsyncpa %s2195, 1

</llo_original>
